<compile_context>
chip_gen: v5e
topology: v5e:2x2
jax: 0.10.0
libtpu: 0.0.40
codegen_flags: <defaults>
</compile_context>

<pallas_src>
import functools

import jax
import jax.numpy as jnp
from jax.experimental import pallas as pl
from jax.experimental.pallas import tpu as pltpu


def _round_up(n, m):
    return ((n + m - 1) // m) * m


def _vpu_supports_bf16():
    """True on chips with a bf16-native VPU (v6e and later); False on <= v5."""
    try:
        kind = jax.devices()[0].device_kind.lower()
    except Exception:
        return False
    for tag in ("v2", "v3", "v4", "v5"):
        if tag in kind:
            return False
    return True


def _pick_tile_pixels(HW, B, tile_pixels):
    """Largest lane-dense pixel tile; prefer one that divides HW exactly."""
    cap = min(tile_pixels, _round_up(HW, 128))
    cap = max(128, (cap // 128) * 128)
    if HW % 128 == 0:
        tp = 128
        t = 128
        while t <= cap:
            if HW % t == 0:
                tp = t
            t += 128
    else:
        tp = cap
    # Feed both TensorCores on multi-core chips (v7x): keep >= 2 grid steps.
    while B * (_round_up(HW, tp) // tp) < 2 and tp % 256 == 0:
        tp //= 2
    return tp


def _pick_chunk(tp, bf16_epilogue):
    """Largest lane-chunk (<= 256 f32 / 512 bf16) that divides the tile."""
    target = 512 if bf16_epilogue else 256
    chunk = 128
    c = 128
    while c <= min(target, tp):
        if tp % c == 0:
            chunk = c
        c += 128
    return chunk


# --------------------------------------------------------------------------
# Kernel factory: per-pixel MLP on a (C, tp) tile, chunked along lanes
# --------------------------------------------------------------------------
def _make_car_kernel(c_in, c_out_total, chunk, n_chunks, bf16_epilogue):
    small_in = c_in <= 8
    small_out = c_out_total <= 8
    act_dt = jnp.bfloat16 if bf16_epilogue else jnp.float32

    def kernel(x_ref,
               w1, b1, a1, w2, b2, a2, w3, b3, a3,
               w4, b4, a4, w5, b5, a5, w6, b6,
               o_ref):
        # Hoist all parameters out of the chunk loop (tiny, VMEM-resident).
        # TODO(synk): verify via pl.lower_as_mlir that no per-dot weight
        # relayout remains; if so, pre-transpose weights in prepare_params.
        W = [w1[...], w2[...], w3[...], w4[...], w5[...], w6[...]]
        Bv = [b1[...], b2[...], b3[...], b4[...], b5[...], b6[...]]
        A = [a1[...].astype(act_dt), a2[...].astype(act_dt),
             a3[...].astype(act_dt), a4[...].astype(act_dt),
             a5[...].astype(act_dt)]

        def prelu(h_f32, a):
            # bias add already done in f32; downcast once, PReLU in act_dt
            h = h_f32.astype(act_dt)
            return jnp.where(h >= 0, h, h * a)

        def to_bf16(h):
            return h if h.dtype == jnp.bfloat16 else h.astype(jnp.bfloat16)

        def process_chunk(start):
            x = x_ref[:, pl.ds(start, chunk)]          # (C_in, chunk) f32

            # ---- layer 1: K = C_in tiny -> VPU broadcast MACs -------------
            if small_in:
                w1f = W[0]                             # (16, C_in) f32
                h = Bv[0] + w1f[:, 0:1] * x[0:1, :]
                for k in range(1, c_in):
                    h = h + w1f[:, k:k + 1] * x[k:k + 1, :]
            else:                                      # MXU, bf16 operands
                h = jnp.dot(W[0], x.astype(jnp.bfloat16),
                            preferred_element_type=jnp.float32) + Bv[0]
            h = prelu(h, A[0])

            # ---- layers 2..5: bf16 MXU matmuls, f32 acc + bias ------------
            for li in range(1, 5):
                h = jnp.dot(W[li], to_bf16(h),
                            preferred_element_type=jnp.float32) + Bv[li]
                h = prelu(h, A[li])

            # ---- layer 6 (no activation) ----------------------------------
            if small_out:                              # tiny M -> VPU MACs
                w6f = W[5]                             # (C_out_total, 16) f32
                out = Bv[5] + w6f[:, 0:1] * h[0:1, :].astype(jnp.float32)
                for k in range(1, W[5].shape[1]):
                    out = out + w6f[:, k:k + 1] * h[k:k + 1, :].astype(jnp.float32)
            else:
                out = jnp.dot(W[5], to_bf16(h),
                              preferred_element_type=jnp.float32) + Bv[5]

            o_ref[:, pl.ds(start, chunk)] = out.astype(jnp.float32)

        # Fully-unrolled static lane-chunk loop (trip count is a Python int;
        # identical trace to lax.fori_loop(..., unroll=True)).  Adjacent
        # chunks are independent chains the scheduler can interleave to hide
        # MXU drain latency.
        for j in range(n_chunks):
            process_chunk(j * chunk)

    return kernel


# --------------------------------------------------------------------------
# Wrapper
# --------------------------------------------------------------------------
def conv_ar_network_forward(x_nchw, params, *, num_params, out_channels,
                            tile_pixels=2048, bf16_epilogue=None):
    """x_nchw: (B, C_in, H, W) f32.  Returns (B, out_channels, H, W, num_params)."""
    if bf16_epilogue is None:
        bf16_epilogue = _vpu_supports_bf16()
    return _forward_jit(x_nchw, params,
                        num_params=num_params, out_channels=out_channels,
                        tile_pixels=int(tile_pixels),
                        bf16_epilogue=bool(bf16_epilogue))


@functools.partial(jax.jit, static_argnames=("num_params", "out_channels",
                                             "tile_pixels", "bf16_epilogue"))
def _forward_jit(x_nchw, params, *, num_params, out_channels, tile_pixels,
                 bf16_epilogue):
    assert tile_pixels % 128 == 0, "tile_pixels must be a multiple of 128"
    B, C_in, H, W = x_nchw.shape
    HW = H * W
    C_out_total = num_params * out_channels

    tp = _pick_tile_pixels(HW, B, tile_pixels)
    HW_pad = _round_up(HW, tp)
    chunk = _pick_chunk(tp, bf16_epilogue)
    n_chunks = tp // chunk

    # NCHW -> (B, C_in, HW): metadata-only reshape, no transpose.
    x = x_nchw.astype(jnp.float32).reshape(B, C_in, HW)
    if HW_pad != HW:
        x = jnp.pad(x, ((0, 0), (0, 0), (0, HW_pad - HW)))

    grid = (B, HW_pad // tp)

    in_specs = [pl.BlockSpec((None, C_in, tp), lambda b, i: (b, 0, i))]
    for p in params:
        # whole (small) parameter array resident in VMEM; bind ndim at loop time
        in_specs.append(pl.BlockSpec(p.shape, lambda b, i, nd=p.ndim: (0,) * nd))
    out_spec = pl.BlockSpec((None, C_out_total, tp), lambda b, i: (b, 0, i))

    # Advisory cost estimate for XLA's scheduler.
    weights = list(params[0:15:3]) + [params[15]]
    flops = 2 * B * HW_pad * sum(int(w.shape[0]) * int(w.shape[1]) for w in weights)
    param_bytes = sum(int(p.size) * p.dtype.itemsize for p in params)
    bytes_accessed = 4 * B * HW_pad * (C_in + C_out_total) + param_bytes

    kernel = _make_car_kernel(C_in, C_out_total, chunk, n_chunks, bf16_epilogue)

    out = pl.pallas_call(
        kernel,
        out_shape=jax.ShapeDtypeStruct((B, C_out_total, HW_pad), jnp.float32),
        grid_spec=pltpu.PrefetchScalarGridSpec(
            num_scalar_prefetch=0,
            grid=grid,
            in_specs=in_specs,
            out_specs=out_spec,
        ),
        compiler_params=pltpu.CompilerParams(
            dimension_semantics=("parallel", "parallel"),
            vmem_limit_bytes=32 * 1024 * 1024,
        ),
        cost_estimate=pl.CostEstimate(
            flops=flops, transcendentals=0, bytes_accessed=bytes_accessed),
    )(x, *params)

    if HW_pad != HW:
        out = out[:, :, :HW]
    conv_out = out.reshape(B, C_out_total, H, W)

    # torch.tensor_split(x, sections=num_params, dim=1) + torch.stack(dim=-1)
    # TODO(synk): this final moveaxis is the one remaining transpose (it only
    # touches the small output tensor); the exact torch output layout
    # (B, OC, H, W, num_params) cannot be produced lane-densely by the kernel.
    return jnp.moveaxis(conv_out.reshape(B, num_params, out_channels, H, W), 1, -1)


# --------------------------------------------------------------------------
# Deterministic parameter construction (matches nn.Module __init__ shapes)
# --------------------------------------------------------------------------
def make_params(key, in_channels, num_params, out_channels):
    dims = [in_channels, 16, 32, 64, 32, 16, num_params * out_channels]
    params = []
    for li in range(6):
        c_in, c_out = dims[li], dims[li + 1]
        key, kw, kb = jax.random.split(key, 3)
        std = (2.0 / c_in) ** 0.5                       # kaiming_normal_, fan_in
        w = jax.random.normal(kw, (c_out, c_in), jnp.float32) * std
        bound = 1.0 / (c_in ** 0.5)                     # default Conv2d bias init
        b = jax.random.uniform(kb, (c_out,), jnp.float32, -bound, bound)
        params.append(w)
        params.append(b)
        if li < 5:
            params.append(jnp.full((c_out,), 0.25, jnp.float32))   # PReLU default
    return params


def prepare_params(raw_params):
    """Cast/reshape raw params into the kernel layout:
       weights (C_out, C_in): f32 for the VPU-path layers (layer 1 when
       C_in <= 8, layer 6 when C_out_total <= 8), bf16 for the MXU layers;
       biases / PReLU alphas as (C_out, 1) f32 columns (broadcast over lanes)."""
    prepared = []
    idx = 0
    for li in range(6):
        w, b = raw_params[idx], raw_params[idx + 1]
        idx += 2
        vpu_layer = (li == 0 and w.shape[1] <= 8) or (li == 5 and w.shape[0] <= 8)
        prepared.append(w.astype(jnp.float32) if vpu_layer else w.astype(jnp.bfloat16))
        prepared.append(b.reshape(-1, 1).astype(jnp.float32))
        if li < 5:
            a = raw_params[idx]
            idx += 1
            prepared.append(a.reshape(-1, 1).astype(jnp.float32))
    return prepared


# --------------------------------------------------------------------------
# Pure-JAX reference with the same dtype policy (correctness check)
# --------------------------------------------------------------------------
def reference_forward(x_nchw, prepared, num_params, out_channels, bf16_epilogue):
    B, C_in, H, W = x_nchw.shape
    h = x_nchw.astype(jnp.float32).reshape(B, C_in, H * W)
    idx = 0
    for li in range(6):
        w, b = prepared[idx], prepared[idx + 1]
        idx += 2
        if w.dtype == jnp.bfloat16:
            h_in = h if h.dtype == jnp.bfloat16 else h.astype(jnp.bfloat16)
            h = jnp.einsum("oc,bcp->bop", w, h_in,
                           preferred_element_type=jnp.float32) + b
        else:
            h = jnp.einsum("oc,bcp->bop", w, h.astype(jnp.float32),
                           preferred_element_type=jnp.float32,
                           precision=jax.lax.Precision.HIGHEST) + b
        if li < 5:
            a = prepared[idx]
            idx += 1
            if bf16_epilogue:
                hb = h.astype(jnp.bfloat16)
                h = jnp.where(hb >= 0, hb, hb * a.astype(jnp.bfloat16))
            else:
                h = jnp.where(h >= 0.0, h, h * a)
    conv_out = h.astype(jnp.float32).reshape(B, num_params * out_channels, H, W)
    return jnp.moveaxis(conv_out.reshape(B, num_params, out_channels, H, W), 1, -1)


if __name__ == "__main__":
    in_channels = 2
    in_features = 16                  # stored by the module but unused in forward()
    num_params = 2
    out_channels = 3 - in_channels    # module default

    key = jax.random.PRNGKey(0)
    key, kx = jax.random.split(key)
    x = jax.random.normal(kx, (2, in_channels, 16, 16), jnp.float32)

    raw = make_params(key, in_channels, num_params, out_channels)
    params = prepare_params(raw)

    bf16_epi = _vpu_supports_bf16()
    out = conv_ar_network_forward(x, params,
                                  num_params=num_params,
                                  out_channels=out_channels,
                                  bf16_epilogue=bf16_epi)
    out = jax.block_until_ready(out)

    ref = reference_forward(x, params, num_params, out_channels, bf16_epi)
    assert out.shape == (2, out_channels, 16, 16, num_params), out.shape
    max_err = float(jnp.max(jnp.abs(out - ref)))
    assert jnp.allclose(out, ref, atol=3e-3, rtol=3e-3), f"mismatch: {max_err}"

    print("KERNEL_OK")
</pallas_src>

<mosaic_0001>
module attributes {stable_mosaic.version = 11 : i64} {
  func.func @kernel(%arg0: i32, %arg1: i32, %arg2: memref<1x2x256xf32, #tpu.memory_space<vmem>>, %arg3: memref<16x2xf32, #tpu.memory_space<vmem>>, %arg4: memref<16x1xf32, #tpu.memory_space<vmem>>, %arg5: memref<16x1xf32, #tpu.memory_space<vmem>>, %arg6: memref<32x16xbf16, #tpu.memory_space<vmem>>, %arg7: memref<32x1xf32, #tpu.memory_space<vmem>>, %arg8: memref<32x1xf32, #tpu.memory_space<vmem>>, %arg9: memref<64x32xbf16, #tpu.memory_space<vmem>>, %arg10: memref<64x1xf32, #tpu.memory_space<vmem>>, %arg11: memref<64x1xf32, #tpu.memory_space<vmem>>, %arg12: memref<32x64xbf16, #tpu.memory_space<vmem>>, %arg13: memref<32x1xf32, #tpu.memory_space<vmem>>, %arg14: memref<32x1xf32, #tpu.memory_space<vmem>>, %arg15: memref<16x32xbf16, #tpu.memory_space<vmem>>, %arg16: memref<16x1xf32, #tpu.memory_space<vmem>>, %arg17: memref<16x1xf32, #tpu.memory_space<vmem>>, %arg18: memref<2x16xf32, #tpu.memory_space<vmem>>, %arg19: memref<2x1xf32, #tpu.memory_space<vmem>>, %arg20: memref<1x2x256xf32, #tpu.memory_space<vmem>>) attributes {dimension_semantics = [#tpu.dimension_semantics<parallel>, #tpu.dimension_semantics<parallel>], iteration_bounds = array<i64: 2, 1>, scalar_prefetch = 0 : i64, scratch_operands = 0 : i64, tpu.core_type = #tpu.core_type<tc>, window_params = [{transform_indices = @transform_0, window_bounds = array<i64: 1, 2, 256>}, {pipeline_mode = #tpu.pipeline_mode<synchronous>, transform_indices = @transform_1, window_bounds = array<i64: 16, 2>}, {pipeline_mode = #tpu.pipeline_mode<synchronous>, transform_indices = @transform_2, window_bounds = array<i64: 16, 1>}, {pipeline_mode = #tpu.pipeline_mode<synchronous>, transform_indices = @transform_3, window_bounds = array<i64: 16, 1>}, {pipeline_mode = #tpu.pipeline_mode<synchronous>, transform_indices = @transform_4, window_bounds = array<i64: 32, 16>}, {pipeline_mode = #tpu.pipeline_mode<synchronous>, transform_indices = @transform_5, window_bounds = array<i64: 32, 1>}, {pipeline_mode = #tpu.pipeline_mode<synchronous>, transform_indices = @transform_6, window_bounds = array<i64: 32, 1>}, {pipeline_mode = #tpu.pipeline_mode<synchronous>, transform_indices = @transform_7, window_bounds = array<i64: 64, 32>}, {pipeline_mode = #tpu.pipeline_mode<synchronous>, transform_indices = @transform_8, window_bounds = array<i64: 64, 1>}, {pipeline_mode = #tpu.pipeline_mode<synchronous>, transform_indices = @transform_9, window_bounds = array<i64: 64, 1>}, {pipeline_mode = #tpu.pipeline_mode<synchronous>, transform_indices = @transform_10, window_bounds = array<i64: 32, 64>}, {pipeline_mode = #tpu.pipeline_mode<synchronous>, transform_indices = @transform_11, window_bounds = array<i64: 32, 1>}, {pipeline_mode = #tpu.pipeline_mode<synchronous>, transform_indices = @transform_12, window_bounds = array<i64: 32, 1>}, {pipeline_mode = #tpu.pipeline_mode<synchronous>, transform_indices = @transform_13, window_bounds = array<i64: 16, 32>}, {pipeline_mode = #tpu.pipeline_mode<synchronous>, transform_indices = @transform_14, window_bounds = array<i64: 16, 1>}, {pipeline_mode = #tpu.pipeline_mode<synchronous>, transform_indices = @transform_15, window_bounds = array<i64: 16, 1>}, {pipeline_mode = #tpu.pipeline_mode<synchronous>, transform_indices = @transform_16, window_bounds = array<i64: 2, 16>}, {pipeline_mode = #tpu.pipeline_mode<synchronous>, transform_indices = @transform_17, window_bounds = array<i64: 2, 1>}, {transform_indices = @transform_18, window_bounds = array<i64: 1, 2, 256>}]} {
    %c0 = arith.constant 0 : index
    %c0_0 = arith.constant 0 : index
    %0 = vector.load %arg3[%c0, %c0_0] : memref<16x2xf32, #tpu.memory_space<vmem>>, vector<16x2xf32>
    %c0_1 = arith.constant 0 : index
    %c0_2 = arith.constant 0 : index
    %1 = vector.load %arg6[%c0_1, %c0_2] : memref<32x16xbf16, #tpu.memory_space<vmem>>, vector<32x16xbf16>
    %c0_3 = arith.constant 0 : index
    %c0_4 = arith.constant 0 : index
    %2 = vector.load %arg9[%c0_3, %c0_4] : memref<64x32xbf16, #tpu.memory_space<vmem>>, vector<64x32xbf16>
    %c0_5 = arith.constant 0 : index
    %c0_6 = arith.constant 0 : index
    %3 = vector.load %arg12[%c0_5, %c0_6] : memref<32x64xbf16, #tpu.memory_space<vmem>>, vector<32x64xbf16>
    %c0_7 = arith.constant 0 : index
    %c0_8 = arith.constant 0 : index
    %4 = vector.load %arg15[%c0_7, %c0_8] : memref<16x32xbf16, #tpu.memory_space<vmem>>, vector<16x32xbf16>
    %c0_9 = arith.constant 0 : index
    %c0_10 = arith.constant 0 : index
    %5 = vector.load %arg18[%c0_9, %c0_10] : memref<2x16xf32, #tpu.memory_space<vmem>>, vector<2x16xf32>
    %c0_11 = arith.constant 0 : index
    %c0_12 = arith.constant 0 : index
    %6 = vector.load %arg4[%c0_11, %c0_12] : memref<16x1xf32, #tpu.memory_space<vmem>>, vector<16x1xf32>
    %c0_13 = arith.constant 0 : index
    %c0_14 = arith.constant 0 : index
    %7 = vector.load %arg7[%c0_13, %c0_14] : memref<32x1xf32, #tpu.memory_space<vmem>>, vector<32x1xf32>
    %c0_15 = arith.constant 0 : index
    %c0_16 = arith.constant 0 : index
    %8 = vector.load %arg10[%c0_15, %c0_16] : memref<64x1xf32, #tpu.memory_space<vmem>>, vector<64x1xf32>
    %c0_17 = arith.constant 0 : index
    %c0_18 = arith.constant 0 : index
    %9 = vector.load %arg13[%c0_17, %c0_18] : memref<32x1xf32, #tpu.memory_space<vmem>>, vector<32x1xf32>
    %c0_19 = arith.constant 0 : index
    %c0_20 = arith.constant 0 : index
    %10 = vector.load %arg16[%c0_19, %c0_20] : memref<16x1xf32, #tpu.memory_space<vmem>>, vector<16x1xf32>
    %c0_21 = arith.constant 0 : index
    %c0_22 = arith.constant 0 : index
    %11 = vector.load %arg19[%c0_21, %c0_22] : memref<2x1xf32, #tpu.memory_space<vmem>>, vector<2x1xf32>
    %c0_23 = arith.constant 0 : index
    %c0_24 = arith.constant 0 : index
    %12 = vector.load %arg5[%c0_23, %c0_24] : memref<16x1xf32, #tpu.memory_space<vmem>>, vector<16x1xf32>
    %13 = arith.truncf %12 : vector<16x1xf32> to vector<16x1xbf16>
    %c0_25 = arith.constant 0 : index
    %c0_26 = arith.constant 0 : index
    %14 = vector.load %arg8[%c0_25, %c0_26] : memref<32x1xf32, #tpu.memory_space<vmem>>, vector<32x1xf32>
    %15 = arith.truncf %14 : vector<32x1xf32> to vector<32x1xbf16>
    %c0_27 = arith.constant 0 : index
    %c0_28 = arith.constant 0 : index
    %16 = vector.load %arg11[%c0_27, %c0_28] : memref<64x1xf32, #tpu.memory_space<vmem>>, vector<64x1xf32>
    %17 = arith.truncf %16 : vector<64x1xf32> to vector<64x1xbf16>
    %c0_29 = arith.constant 0 : index
    %c0_30 = arith.constant 0 : index
    %18 = vector.load %arg14[%c0_29, %c0_30] : memref<32x1xf32, #tpu.memory_space<vmem>>, vector<32x1xf32>
    %19 = arith.truncf %18 : vector<32x1xf32> to vector<32x1xbf16>
    %c0_31 = arith.constant 0 : index
    %c0_32 = arith.constant 0 : index
    %20 = vector.load %arg17[%c0_31, %c0_32] : memref<16x1xf32, #tpu.memory_space<vmem>>, vector<16x1xf32>
    %21 = arith.truncf %20 : vector<16x1xf32> to vector<16x1xbf16>
    %c0_33 = arith.constant 0 : index
    %c0_34 = arith.constant 0 : index
    %c0_35 = arith.constant 0 : index
    %22 = vector.load %arg2[%c0_33, %c0_34, %c0_35] : memref<1x2x256xf32, #tpu.memory_space<vmem>>, vector<1x2x256xf32>
    %23 = vector.shape_cast %22 : vector<1x2x256xf32> to vector<2x256xf32>
    %24 = vector.extract_strided_slice %0 {offsets = [0, 0], sizes = [16, 1], strides = [1, 1]} : vector<16x2xf32> to vector<16x1xf32>
    %25 = vector.extract_strided_slice %23 {offsets = [0, 0], sizes = [1, 256], strides = [1, 1]} : vector<2x256xf32> to vector<1x256xf32>
    %26 = vector.broadcast %24 : vector<16x1xf32> to vector<16x256xf32>
    %27 = vector.broadcast %25 : vector<1x256xf32> to vector<16x256xf32>
    %28 = arith.mulf %26, %27 : vector<16x256xf32>
    %29 = vector.broadcast %6 : vector<16x1xf32> to vector<16x256xf32>
    %30 = arith.addf %29, %28 : vector<16x256xf32>
    %31 = vector.extract_strided_slice %0 {offsets = [0, 1], sizes = [16, 1], strides = [1, 1]} : vector<16x2xf32> to vector<16x1xf32>
    %32 = vector.extract_strided_slice %23 {offsets = [1, 0], sizes = [1, 256], strides = [1, 1]} : vector<2x256xf32> to vector<1x256xf32>
    %33 = vector.broadcast %31 : vector<16x1xf32> to vector<16x256xf32>
    %34 = vector.broadcast %32 : vector<1x256xf32> to vector<16x256xf32>
    %35 = arith.mulf %33, %34 : vector<16x256xf32>
    %36 = arith.addf %30, %35 : vector<16x256xf32>
    %37 = arith.truncf %36 : vector<16x256xf32> to vector<16x256xbf16>
    %cst = arith.constant 0.000000e+00 : bf16
    %38 = vector.broadcast %cst : bf16 to vector<16x256xbf16>
    %39 = arith.cmpf oge, %37, %38 : vector<16x256xbf16>
    %40 = vector.broadcast %13 : vector<16x1xbf16> to vector<16x256xbf16>
    %41 = arith.mulf %37, %40 : vector<16x256xbf16>
    %42 = arith.select %39, %37, %41 : vector<16x256xi1>, vector<16x256xbf16>
    %cst_36 = arith.constant dense<0.000000e+00> : vector<32x256xf32>
    %43 = tpu.matmul %1, %42, %cst_36 {dimension_numbers = #tpu.dot_dimension_numbers<[1], [0], [0], [1], [0, 0, 1, 1], [], []>} : vector<32x16xbf16>, vector<16x256xbf16>, vector<32x256xf32> -> vector<32x256xf32>
    %44 = vector.broadcast %7 : vector<32x1xf32> to vector<32x256xf32>
    %45 = arith.addf %43, %44 : vector<32x256xf32>
    %46 = arith.truncf %45 : vector<32x256xf32> to vector<32x256xbf16>
    %cst_37 = arith.constant 0.000000e+00 : bf16
    %47 = vector.broadcast %cst_37 : bf16 to vector<32x256xbf16>
    %48 = arith.cmpf oge, %46, %47 : vector<32x256xbf16>
    %49 = vector.broadcast %15 : vector<32x1xbf16> to vector<32x256xbf16>
    %50 = arith.mulf %46, %49 : vector<32x256xbf16>
    %51 = arith.select %48, %46, %50 : vector<32x256xi1>, vector<32x256xbf16>
    %cst_38 = arith.constant dense<0.000000e+00> : vector<64x256xf32>
    %52 = tpu.matmul %2, %51, %cst_38 {dimension_numbers = #tpu.dot_dimension_numbers<[1], [0], [0], [1], [0, 0, 1, 1], [], []>} : vector<64x32xbf16>, vector<32x256xbf16>, vector<64x256xf32> -> vector<64x256xf32>
    %53 = vector.broadcast %8 : vector<64x1xf32> to vector<64x256xf32>
    %54 = arith.addf %52, %53 : vector<64x256xf32>
    %55 = arith.truncf %54 : vector<64x256xf32> to vector<64x256xbf16>
    %cst_39 = arith.constant 0.000000e+00 : bf16
    %56 = vector.broadcast %cst_39 : bf16 to vector<64x256xbf16>
    %57 = arith.cmpf oge, %55, %56 : vector<64x256xbf16>
    %58 = vector.broadcast %17 : vector<64x1xbf16> to vector<64x256xbf16>
    %59 = arith.mulf %55, %58 : vector<64x256xbf16>
    %60 = arith.select %57, %55, %59 : vector<64x256xi1>, vector<64x256xbf16>
    %cst_40 = arith.constant dense<0.000000e+00> : vector<32x256xf32>
    %61 = tpu.matmul %3, %60, %cst_40 {dimension_numbers = #tpu.dot_dimension_numbers<[1], [0], [0], [1], [0, 0, 1, 1], [], []>} : vector<32x64xbf16>, vector<64x256xbf16>, vector<32x256xf32> -> vector<32x256xf32>
    %62 = vector.broadcast %9 : vector<32x1xf32> to vector<32x256xf32>
    %63 = arith.addf %61, %62 : vector<32x256xf32>
    %64 = arith.truncf %63 : vector<32x256xf32> to vector<32x256xbf16>
    %cst_41 = arith.constant 0.000000e+00 : bf16
    %65 = vector.broadcast %cst_41 : bf16 to vector<32x256xbf16>
    %66 = arith.cmpf oge, %64, %65 : vector<32x256xbf16>
    %67 = vector.broadcast %19 : vector<32x1xbf16> to vector<32x256xbf16>
    %68 = arith.mulf %64, %67 : vector<32x256xbf16>
    %69 = arith.select %66, %64, %68 : vector<32x256xi1>, vector<32x256xbf16>
    %cst_42 = arith.constant dense<0.000000e+00> : vector<16x256xf32>
    %70 = tpu.matmul %4, %69, %cst_42 {dimension_numbers = #tpu.dot_dimension_numbers<[1], [0], [0], [1], [0, 0, 1, 1], [], []>} : vector<16x32xbf16>, vector<32x256xbf16>, vector<16x256xf32> -> vector<16x256xf32>
    %71 = vector.broadcast %10 : vector<16x1xf32> to vector<16x256xf32>
    %72 = arith.addf %70, %71 : vector<16x256xf32>
    %73 = arith.truncf %72 : vector<16x256xf32> to vector<16x256xbf16>
    %cst_43 = arith.constant 0.000000e+00 : bf16
    %74 = vector.broadcast %cst_43 : bf16 to vector<16x256xbf16>
    %75 = arith.cmpf oge, %73, %74 : vector<16x256xbf16>
    %76 = vector.broadcast %21 : vector<16x1xbf16> to vector<16x256xbf16>
    %77 = arith.mulf %73, %76 : vector<16x256xbf16>
    %78 = arith.select %75, %73, %77 : vector<16x256xi1>, vector<16x256xbf16>
    %79 = vector.extract_strided_slice %5 {offsets = [0, 0], sizes = [2, 1], strides = [1, 1]} : vector<2x16xf32> to vector<2x1xf32>
    %80 = vector.extract_strided_slice %78 {offsets = [0, 0], sizes = [1, 256], strides = [1, 1]} : vector<16x256xbf16> to vector<1x256xbf16>
    %81 = arith.extf %80 : vector<1x256xbf16> to vector<1x256xf32>
    %82 = vector.broadcast %79 : vector<2x1xf32> to vector<2x256xf32>
    %83 = vector.broadcast %81 : vector<1x256xf32> to vector<2x256xf32>
    %84 = arith.mulf %82, %83 : vector<2x256xf32>
    %85 = vector.broadcast %11 : vector<2x1xf32> to vector<2x256xf32>
    %86 = arith.addf %85, %84 : vector<2x256xf32>
    %87 = vector.extract_strided_slice %5 {offsets = [0, 1], sizes = [2, 1], strides = [1, 1]} : vector<2x16xf32> to vector<2x1xf32>
    %88 = vector.extract_strided_slice %78 {offsets = [1, 0], sizes = [1, 256], strides = [1, 1]} : vector<16x256xbf16> to vector<1x256xbf16>
    %89 = arith.extf %88 : vector<1x256xbf16> to vector<1x256xf32>
    %90 = vector.broadcast %87 : vector<2x1xf32> to vector<2x256xf32>
    %91 = vector.broadcast %89 : vector<1x256xf32> to vector<2x256xf32>
    %92 = arith.mulf %90, %91 : vector<2x256xf32>
    %93 = arith.addf %86, %92 : vector<2x256xf32>
    %94 = vector.extract_strided_slice %5 {offsets = [0, 2], sizes = [2, 1], strides = [1, 1]} : vector<2x16xf32> to vector<2x1xf32>
    %95 = vector.extract_strided_slice %78 {offsets = [2, 0], sizes = [1, 256], strides = [1, 1]} : vector<16x256xbf16> to vector<1x256xbf16>
    %96 = arith.extf %95 : vector<1x256xbf16> to vector<1x256xf32>
    %97 = vector.broadcast %94 : vector<2x1xf32> to vector<2x256xf32>
    %98 = vector.broadcast %96 : vector<1x256xf32> to vector<2x256xf32>
    %99 = arith.mulf %97, %98 : vector<2x256xf32>
    %100 = arith.addf %93, %99 : vector<2x256xf32>
    %101 = vector.extract_strided_slice %5 {offsets = [0, 3], sizes = [2, 1], strides = [1, 1]} : vector<2x16xf32> to vector<2x1xf32>
    %102 = vector.extract_strided_slice %78 {offsets = [3, 0], sizes = [1, 256], strides = [1, 1]} : vector<16x256xbf16> to vector<1x256xbf16>
    %103 = arith.extf %102 : vector<1x256xbf16> to vector<1x256xf32>
    %104 = vector.broadcast %101 : vector<2x1xf32> to vector<2x256xf32>
    %105 = vector.broadcast %103 : vector<1x256xf32> to vector<2x256xf32>
    %106 = arith.mulf %104, %105 : vector<2x256xf32>
    %107 = arith.addf %100, %106 : vector<2x256xf32>
    %108 = vector.extract_strided_slice %5 {offsets = [0, 4], sizes = [2, 1], strides = [1, 1]} : vector<2x16xf32> to vector<2x1xf32>
    %109 = vector.extract_strided_slice %78 {offsets = [4, 0], sizes = [1, 256], strides = [1, 1]} : vector<16x256xbf16> to vector<1x256xbf16>
    %110 = arith.extf %109 : vector<1x256xbf16> to vector<1x256xf32>
    %111 = vector.broadcast %108 : vector<2x1xf32> to vector<2x256xf32>
    %112 = vector.broadcast %110 : vector<1x256xf32> to vector<2x256xf32>
    %113 = arith.mulf %111, %112 : vector<2x256xf32>
    %114 = arith.addf %107, %113 : vector<2x256xf32>
    %115 = vector.extract_strided_slice %5 {offsets = [0, 5], sizes = [2, 1], strides = [1, 1]} : vector<2x16xf32> to vector<2x1xf32>
    %116 = vector.extract_strided_slice %78 {offsets = [5, 0], sizes = [1, 256], strides = [1, 1]} : vector<16x256xbf16> to vector<1x256xbf16>
    %117 = arith.extf %116 : vector<1x256xbf16> to vector<1x256xf32>
    %118 = vector.broadcast %115 : vector<2x1xf32> to vector<2x256xf32>
    %119 = vector.broadcast %117 : vector<1x256xf32> to vector<2x256xf32>
    %120 = arith.mulf %118, %119 : vector<2x256xf32>
    %121 = arith.addf %114, %120 : vector<2x256xf32>
    %122 = vector.extract_strided_slice %5 {offsets = [0, 6], sizes = [2, 1], strides = [1, 1]} : vector<2x16xf32> to vector<2x1xf32>
    %123 = vector.extract_strided_slice %78 {offsets = [6, 0], sizes = [1, 256], strides = [1, 1]} : vector<16x256xbf16> to vector<1x256xbf16>
    %124 = arith.extf %123 : vector<1x256xbf16> to vector<1x256xf32>
    %125 = vector.broadcast %122 : vector<2x1xf32> to vector<2x256xf32>
    %126 = vector.broadcast %124 : vector<1x256xf32> to vector<2x256xf32>
    %127 = arith.mulf %125, %126 : vector<2x256xf32>
    %128 = arith.addf %121, %127 : vector<2x256xf32>
    %129 = vector.extract_strided_slice %5 {offsets = [0, 7], sizes = [2, 1], strides = [1, 1]} : vector<2x16xf32> to vector<2x1xf32>
    %130 = vector.extract_strided_slice %78 {offsets = [7, 0], sizes = [1, 256], strides = [1, 1]} : vector<16x256xbf16> to vector<1x256xbf16>
    %131 = arith.extf %130 : vector<1x256xbf16> to vector<1x256xf32>
    %132 = vector.broadcast %129 : vector<2x1xf32> to vector<2x256xf32>
    %133 = vector.broadcast %131 : vector<1x256xf32> to vector<2x256xf32>
    %134 = arith.mulf %132, %133 : vector<2x256xf32>
    %135 = arith.addf %128, %134 : vector<2x256xf32>
    %136 = vector.extract_strided_slice %5 {offsets = [0, 8], sizes = [2, 1], strides = [1, 1]} : vector<2x16xf32> to vector<2x1xf32>
    %137 = vector.extract_strided_slice %78 {offsets = [8, 0], sizes = [1, 256], strides = [1, 1]} : vector<16x256xbf16> to vector<1x256xbf16>
    %138 = arith.extf %137 : vector<1x256xbf16> to vector<1x256xf32>
    %139 = vector.broadcast %136 : vector<2x1xf32> to vector<2x256xf32>
    %140 = vector.broadcast %138 : vector<1x256xf32> to vector<2x256xf32>
    %141 = arith.mulf %139, %140 : vector<2x256xf32>
    %142 = arith.addf %135, %141 : vector<2x256xf32>
    %143 = vector.extract_strided_slice %5 {offsets = [0, 9], sizes = [2, 1], strides = [1, 1]} : vector<2x16xf32> to vector<2x1xf32>
    %144 = vector.extract_strided_slice %78 {offsets = [9, 0], sizes = [1, 256], strides = [1, 1]} : vector<16x256xbf16> to vector<1x256xbf16>
    %145 = arith.extf %144 : vector<1x256xbf16> to vector<1x256xf32>
    %146 = vector.broadcast %143 : vector<2x1xf32> to vector<2x256xf32>
    %147 = vector.broadcast %145 : vector<1x256xf32> to vector<2x256xf32>
    %148 = arith.mulf %146, %147 : vector<2x256xf32>
    %149 = arith.addf %142, %148 : vector<2x256xf32>
    %150 = vector.extract_strided_slice %5 {offsets = [0, 10], sizes = [2, 1], strides = [1, 1]} : vector<2x16xf32> to vector<2x1xf32>
    %151 = vector.extract_strided_slice %78 {offsets = [10, 0], sizes = [1, 256], strides = [1, 1]} : vector<16x256xbf16> to vector<1x256xbf16>
    %152 = arith.extf %151 : vector<1x256xbf16> to vector<1x256xf32>
    %153 = vector.broadcast %150 : vector<2x1xf32> to vector<2x256xf32>
    %154 = vector.broadcast %152 : vector<1x256xf32> to vector<2x256xf32>
    %155 = arith.mulf %153, %154 : vector<2x256xf32>
    %156 = arith.addf %149, %155 : vector<2x256xf32>
    %157 = vector.extract_strided_slice %5 {offsets = [0, 11], sizes = [2, 1], strides = [1, 1]} : vector<2x16xf32> to vector<2x1xf32>
    %158 = vector.extract_strided_slice %78 {offsets = [11, 0], sizes = [1, 256], strides = [1, 1]} : vector<16x256xbf16> to vector<1x256xbf16>
    %159 = arith.extf %158 : vector<1x256xbf16> to vector<1x256xf32>
    %160 = vector.broadcast %157 : vector<2x1xf32> to vector<2x256xf32>
    %161 = vector.broadcast %159 : vector<1x256xf32> to vector<2x256xf32>
    %162 = arith.mulf %160, %161 : vector<2x256xf32>
    %163 = arith.addf %156, %162 : vector<2x256xf32>
    %164 = vector.extract_strided_slice %5 {offsets = [0, 12], sizes = [2, 1], strides = [1, 1]} : vector<2x16xf32> to vector<2x1xf32>
    %165 = vector.extract_strided_slice %78 {offsets = [12, 0], sizes = [1, 256], strides = [1, 1]} : vector<16x256xbf16> to vector<1x256xbf16>
    %166 = arith.extf %165 : vector<1x256xbf16> to vector<1x256xf32>
    %167 = vector.broadcast %164 : vector<2x1xf32> to vector<2x256xf32>
    %168 = vector.broadcast %166 : vector<1x256xf32> to vector<2x256xf32>
    %169 = arith.mulf %167, %168 : vector<2x256xf32>
    %170 = arith.addf %163, %169 : vector<2x256xf32>
    %171 = vector.extract_strided_slice %5 {offsets = [0, 13], sizes = [2, 1], strides = [1, 1]} : vector<2x16xf32> to vector<2x1xf32>
    %172 = vector.extract_strided_slice %78 {offsets = [13, 0], sizes = [1, 256], strides = [1, 1]} : vector<16x256xbf16> to vector<1x256xbf16>
    %173 = arith.extf %172 : vector<1x256xbf16> to vector<1x256xf32>
    %174 = vector.broadcast %171 : vector<2x1xf32> to vector<2x256xf32>
    %175 = vector.broadcast %173 : vector<1x256xf32> to vector<2x256xf32>
    %176 = arith.mulf %174, %175 : vector<2x256xf32>
    %177 = arith.addf %170, %176 : vector<2x256xf32>
    %178 = vector.extract_strided_slice %5 {offsets = [0, 14], sizes = [2, 1], strides = [1, 1]} : vector<2x16xf32> to vector<2x1xf32>
    %179 = vector.extract_strided_slice %78 {offsets = [14, 0], sizes = [1, 256], strides = [1, 1]} : vector<16x256xbf16> to vector<1x256xbf16>
    %180 = arith.extf %179 : vector<1x256xbf16> to vector<1x256xf32>
    %181 = vector.broadcast %178 : vector<2x1xf32> to vector<2x256xf32>
    %182 = vector.broadcast %180 : vector<1x256xf32> to vector<2x256xf32>
    %183 = arith.mulf %181, %182 : vector<2x256xf32>
    %184 = arith.addf %177, %183 : vector<2x256xf32>
    %185 = vector.extract_strided_slice %5 {offsets = [0, 15], sizes = [2, 1], strides = [1, 1]} : vector<2x16xf32> to vector<2x1xf32>
    %186 = vector.extract_strided_slice %78 {offsets = [15, 0], sizes = [1, 256], strides = [1, 1]} : vector<16x256xbf16> to vector<1x256xbf16>
    %187 = arith.extf %186 : vector<1x256xbf16> to vector<1x256xf32>
    %188 = vector.broadcast %185 : vector<2x1xf32> to vector<2x256xf32>
    %189 = vector.broadcast %187 : vector<1x256xf32> to vector<2x256xf32>
    %190 = arith.mulf %188, %189 : vector<2x256xf32>
    %191 = arith.addf %184, %190 : vector<2x256xf32>
    %c0_44 = arith.constant 0 : index
    %c0_45 = arith.constant 0 : index
    %c0_46 = arith.constant 0 : index
    %192 = vector.load %arg20[%c0_44, %c0_45, %c0_46] : memref<1x2x256xf32, #tpu.memory_space<vmem>>, vector<1x2x256xf32>
    %193 = vector.shape_cast %192 : vector<1x2x256xf32> to vector<2x256xf32>
    %194 = vector.shape_cast %191 : vector<2x256xf32> to vector<1x2x256xf32>
    tpu.vector_store %arg20[%c0_44, %c0_45, %c0_46], %194 {strides = array<i32>} : memref<1x2x256xf32, #tpu.memory_space<vmem>>, vector<1x2x256xf32>,
    return
  }
  func.func @transform_0(%arg0: i32, %arg1: i32) -> (i32, i32, i32) {
    %c0_i32 = arith.constant 0 : i32
    %c0_i32_0 = arith.constant 0 : i32
    return %arg0, %c0_i32, %arg1 : i32, i32, i32
  }
  func.func @transform_1(%arg0: i32, %arg1: i32) -> (i32, i32) {
    %c0_i32 = arith.constant 0 : i32
    %c0_i32_0 = arith.constant 0 : i32
    %c0_i32_1 = arith.constant 0 : i32
    return %c0_i32, %c0_i32_0 : i32, i32
  }
  func.func @transform_2(%arg0: i32, %arg1: i32) -> (i32, i32) {
    %c0_i32 = arith.constant 0 : i32
    %c0_i32_0 = arith.constant 0 : i32
    %c0_i32_1 = arith.constant 0 : i32
    return %c0_i32, %c0_i32_0 : i32, i32
  }
  func.func @transform_3(%arg0: i32, %arg1: i32) -> (i32, i32) {
    %c0_i32 = arith.constant 0 : i32
    %c0_i32_0 = arith.constant 0 : i32
    %c0_i32_1 = arith.constant 0 : i32
    return %c0_i32, %c0_i32_0 : i32, i32
  }
  func.func @transform_4(%arg0: i32, %arg1: i32) -> (i32, i32) {
    %c0_i32 = arith.constant 0 : i32
    %c0_i32_0 = arith.constant 0 : i32
    %c0_i32_1 = arith.constant 0 : i32
    return %c0_i32, %c0_i32_0 : i32, i32
  }
  func.func @transform_5(%arg0: i32, %arg1: i32) -> (i32, i32) {
    %c0_i32 = arith.constant 0 : i32
    %c0_i32_0 = arith.constant 0 : i32
    %c0_i32_1 = arith.constant 0 : i32
    return %c0_i32, %c0_i32_0 : i32, i32
  }
  func.func @transform_6(%arg0: i32, %arg1: i32) -> (i32, i32) {
    %c0_i32 = arith.constant 0 : i32
    %c0_i32_0 = arith.constant 0 : i32
    %c0_i32_1 = arith.constant 0 : i32
    return %c0_i32, %c0_i32_0 : i32, i32
  }
  func.func @transform_7(%arg0: i32, %arg1: i32) -> (i32, i32) {
    %c0_i32 = arith.constant 0 : i32
    %c0_i32_0 = arith.constant 0 : i32
    %c0_i32_1 = arith.constant 0 : i32
    return %c0_i32, %c0_i32_0 : i32, i32
  }
  func.func @transform_8(%arg0: i32, %arg1: i32) -> (i32, i32) {
    %c0_i32 = arith.constant 0 : i32
    %c0_i32_0 = arith.constant 0 : i32
    %c0_i32_1 = arith.constant 0 : i32
    return %c0_i32, %c0_i32_0 : i32, i32
  }
  func.func @transform_9(%arg0: i32, %arg1: i32) -> (i32, i32) {
    %c0_i32 = arith.constant 0 : i32
    %c0_i32_0 = arith.constant 0 : i32
    %c0_i32_1 = arith.constant 0 : i32
    return %c0_i32, %c0_i32_0 : i32, i32
  }
  func.func @transform_10(%arg0: i32, %arg1: i32) -> (i32, i32) {
    %c0_i32 = arith.constant 0 : i32
    %c0_i32_0 = arith.constant 0 : i32
    %c0_i32_1 = arith.constant 0 : i32
    return %c0_i32, %c0_i32_0 : i32, i32
  }
  func.func @transform_11(%arg0: i32, %arg1: i32) -> (i32, i32) {
    %c0_i32 = arith.constant 0 : i32
    %c0_i32_0 = arith.constant 0 : i32
    %c0_i32_1 = arith.constant 0 : i32
    return %c0_i32, %c0_i32_0 : i32, i32
  }
  func.func @transform_12(%arg0: i32, %arg1: i32) -> (i32, i32) {
    %c0_i32 = arith.constant 0 : i32
    %c0_i32_0 = arith.constant 0 : i32
    %c0_i32_1 = arith.constant 0 : i32
    return %c0_i32, %c0_i32_0 : i32, i32
  }
  func.func @transform_13(%arg0: i32, %arg1: i32) -> (i32, i32) {
    %c0_i32 = arith.constant 0 : i32
    %c0_i32_0 = arith.constant 0 : i32
    %c0_i32_1 = arith.constant 0 : i32
    return %c0_i32, %c0_i32_0 : i32, i32
  }
  func.func @transform_14(%arg0: i32, %arg1: i32) -> (i32, i32) {
    %c0_i32 = arith.constant 0 : i32
    %c0_i32_0 = arith.constant 0 : i32
    %c0_i32_1 = arith.constant 0 : i32
    return %c0_i32, %c0_i32_0 : i32, i32
  }
  func.func @transform_15(%arg0: i32, %arg1: i32) -> (i32, i32) {
    %c0_i32 = arith.constant 0 : i32
    %c0_i32_0 = arith.constant 0 : i32
    %c0_i32_1 = arith.constant 0 : i32
    return %c0_i32, %c0_i32_0 : i32, i32
  }
  func.func @transform_16(%arg0: i32, %arg1: i32) -> (i32, i32) {
    %c0_i32 = arith.constant 0 : i32
    %c0_i32_0 = arith.constant 0 : i32
    %c0_i32_1 = arith.constant 0 : i32
    return %c0_i32, %c0_i32_0 : i32, i32
  }
  func.func @transform_17(%arg0: i32, %arg1: i32) -> (i32, i32) {
    %c0_i32 = arith.constant 0 : i32
    %c0_i32_0 = arith.constant 0 : i32
    %c0_i32_1 = arith.constant 0 : i32
    return %c0_i32, %c0_i32_0 : i32, i32
  }
  func.func @transform_18(%arg0: i32, %arg1: i32) -> (i32, i32, i32) {
    %c0_i32 = arith.constant 0 : i32
    %c0_i32_0 = arith.constant 0 : i32
    return %arg0, %c0_i32, %arg1 : i32, i32, i32
  }
}

</mosaic_0001>

<llo_original>
// kernel: _forward_jit.1
$region0: #{_forward_jit.1}
  #allocation0 [shape = 'u32[]', space=smem, size = 0x4, offset = 0x4, fixed_abs, tag = 'smem constant byte address 0x4 - core index']
  #allocation1 [shape = 'u32[72,128]{1,0:T(1,128)}', space=vmem, size = 0x9000, scoped, tag = 'internal scratch']
  %s0 = inlined_call_operand.vmem [shape: f32[2,2,256], index: 0, kind: input, shape index: {}]
  %s1 = inlined_call_operand.vmem [shape: f32[16,2], index: 1, kind: input, shape index: {}]
  %s2 = inlined_call_operand.vmem [shape: f32[16,1], index: 2, kind: input, shape index: {}]
  %s3 = inlined_call_operand.vmem [shape: f32[16,1], index: 3, kind: input, shape index: {}]
  %s4 = inlined_call_operand.vmem [shape: bf16[32,16], index: 4, kind: input, shape index: {}]
  %s5 = inlined_call_operand.vmem [shape: f32[32,1], index: 5, kind: input, shape index: {}]
  %s6 = inlined_call_operand.vmem [shape: f32[32,1], index: 6, kind: input, shape index: {}]
  %s7 = inlined_call_operand.vmem [shape: bf16[64,32], index: 7, kind: input, shape index: {}]
  %s8 = inlined_call_operand.vmem [shape: f32[64,1], index: 8, kind: input, shape index: {}]
  %s9 = inlined_call_operand.vmem [shape: f32[64,1], index: 9, kind: input, shape index: {}]
  %s10 = inlined_call_operand.vmem [shape: bf16[32,64], index: 10, kind: input, shape index: {}]
  %s11 = inlined_call_operand.vmem [shape: f32[32,1], index: 11, kind: input, shape index: {}]
  %s12 = inlined_call_operand.vmem [shape: f32[32,1], index: 12, kind: input, shape index: {}]
  %s13 = inlined_call_operand.vmem [shape: bf16[16,32], index: 13, kind: input, shape index: {}]
  %s14 = inlined_call_operand.vmem [shape: f32[16,1], index: 14, kind: input, shape index: {}]
  %s15 = inlined_call_operand.vmem [shape: f32[16,1], index: 15, kind: input, shape index: {}]
  %s16 = inlined_call_operand.vmem [shape: f32[2,16], index: 16, kind: input, shape index: {}]
  %s17 = inlined_call_operand.vmem [shape: f32[2,1], index: 17, kind: input, shape index: {}]
  %s18 = inlined_call_operand.vmem [shape: f32[2,2,256], index: 18, kind: output, shape index: {}]
  %s19 = sld [smem:[#allocation0]]
  $region105: #{_forward_jit.1} parent=0
    _
  %s21 = ssub.s32 1, %s19
  %s22 = scalar_select 0, %s21, %s19
  loop: start=0, step=1, limit=4
  $region2: #{_forward_jit.1} parent=0 // loop_pre_header
    _
  $region3: #{_forward_jit.1} parent=0 // loop_header
    %s24 = sphi 0, %s28
    %p25 = scmp.ge.s32.totalorder %s24, 4
    %s31 = sphi 0, %s43
    %s32 = sphi 0, %s39
    %s33 = sphi 0, %s31
    %s34 = sphi 0, %s32
    %s35 = sphi 0, %s33
    %s36 = sphi 0, %s34
    %s48 = sphi 0, %s50
    %s51 = sphi 0, %s48
    %s52 = sphi 0, %s51
    %s68 = sphi 0, %s52
    %s72 = sphi 0, %s72
    %s74 = sphi 0, %s72
    %s75 = sphi 0, %s74
    %s89 = sphi 0, %s75
    %s93 = sphi 0, %s93
    %s95 = sphi 0, %s93
    %s96 = sphi 0, %s95
    %s110 = sphi 0, %s96
    %s114 = sphi 0, %s114
    %s116 = sphi 0, %s114
    %s117 = sphi 0, %s116
    %s131 = sphi 0, %s117
    %s135 = sphi 0, %s135
    %s137 = sphi 0, %s135
    %s138 = sphi 0, %s137
    %s152 = sphi 0, %s138
    %s156 = sphi 0, %s156
    %s158 = sphi 0, %s156
    %s159 = sphi 0, %s158
    %s173 = sphi 0, %s159
    %s177 = sphi 0, %s177
    %s179 = sphi 0, %s177
    %s180 = sphi 0, %s179
    %s194 = sphi 0, %s180
    %s198 = sphi 0, %s198
    %s200 = sphi 0, %s198
    %s201 = sphi 0, %s200
    %s215 = sphi 0, %s201
    %s219 = sphi 0, %s219
    %s221 = sphi 0, %s219
    %s222 = sphi 0, %s221
    %s236 = sphi 0, %s222
    %s240 = sphi 0, %s240
    %s242 = sphi 0, %s240
    %s243 = sphi 0, %s242
    %s257 = sphi 0, %s243
    %s261 = sphi 0, %s261
    %s263 = sphi 0, %s261
    %s264 = sphi 0, %s263
    %s278 = sphi 0, %s264
    %s282 = sphi 0, %s282
    %s284 = sphi 0, %s282
    %s285 = sphi 0, %s284
    %s299 = sphi 0, %s285
    %s303 = sphi 0, %s303
    %s305 = sphi 0, %s303
    %s306 = sphi 0, %s305
    %s320 = sphi 0, %s306
    %s324 = sphi 0, %s324
    %s326 = sphi 0, %s324
    %s327 = sphi 0, %s326
    %s341 = sphi 0, %s327
    %s345 = sphi 0, %s345
    %s347 = sphi 0, %s345
    %s348 = sphi 0, %s347
    %s362 = sphi 0, %s348
    %s366 = sphi 0, %s366
    %s368 = sphi 0, %s366
    %s369 = sphi 0, %s368
    %s383 = sphi 0, %s369
    %s387 = sphi 0, %s387
    %s389 = sphi 0, %s387
    %s390 = sphi 0, %s389
    %s404 = sphi 0, %s390
    %s408 = sphi 0, %s408
    %s410 = sphi 0, %s408
    %s411 = sphi 0, %s410
    %s425 = sphi 0, %s411
    %s433 = sphi 0, %s435
    %s436 = sphi 0, %s433
    %s437 = sphi 0, %s436
    %s453 = sphi 0, %s437
  $region4: #{_forward_jit.1} parent=0 // loop_header_branch
    %27 = sbr.rel (%p25) target = $region8
  $region5: #{_forward_jit.1} parent=0 // loop_body
    %s29 = ssub.s32 %s24, 1
    %s30 = ssub.s32 %s24, 2
    %s37 = sadd.s32 1, %s32
    %p38 = scmp.ge.s32.totalorder %s37, 1
    %s39 = scalar_select %p38, 0, %s37
    %s40 = sadd.s32 1, %s31
    %s41 = scalar_select %p38, %s40, %s31
    %p42 = scmp.ge.s32.totalorder %s41, 2
    %s43 = scalar_select %p42, 0, %s41
    %s44 = ssub.s32 %s31, %s43
    %s45 = ssub.s32 %s32, %s39
    %s46 = sor.u32 %s44, %s45
    %p47 = scmp.eq.s32.totalorder %s46, 0
    %s49 = sadd.s32 %s48, 1
    %s50 = scalar_select %p47, %s48, %s49
    %p53 = pneg %p47
    %p54 = scmp.eq.s32.totalorder %s24, 1
    %p55 = por %p53, %p54
    %p56 = scmp.ne.s32.totalorder %s48, %s51
    %p57 = scmp.eq.s32.totalorder %s24, 0
    %p58 = por %p56, %p57
    %p59 = scmp.ne.s32.totalorder %s48, %s51
    %p60 = scmp.eq.s32.totalorder %s29, 1
    %p61 = por %p59, %p60
    %p62 = scmp.ne.s32.totalorder %s51, %s52
    %p63 = scmp.eq.s32.totalorder %s29, 0
    %p64 = por %p62, %p63
    %p65 = scmp.ne.s32.totalorder %s51, %s52
    %p66 = scmp.eq.s32.totalorder %s30, 1
    %p67 = por %p65, %p66
    %p69 = scmp.ne.s32.totalorder %s52, %s68
    %p70 = scmp.eq.s32.totalorder %s30, 0
    %p71 = por %p69, %p70
    %s73 = sadd.s32 %s72, 1
    %p76 = scmp.eq.s32.totalorder %s24, 1
    %p77 = scmp.ne.s32.totalorder %s72, %s74
    %p78 = scmp.eq.s32.totalorder %s24, 0
    %p79 = por %p77, %p78
    %p80 = scmp.ne.s32.totalorder %s72, %s74
    %p81 = scmp.eq.s32.totalorder %s29, 1
    %p82 = por %p80, %p81
    %p83 = scmp.ne.s32.totalorder %s74, %s75
    %p84 = scmp.eq.s32.totalorder %s29, 0
    %p85 = por %p83, %p84
    %p86 = scmp.ne.s32.totalorder %s74, %s75
    %p87 = scmp.eq.s32.totalorder %s30, 1
    %p88 = por %p86, %p87
    %p90 = scmp.ne.s32.totalorder %s75, %s89
    %p91 = scmp.eq.s32.totalorder %s30, 0
    %p92 = por %p90, %p91
    %s94 = sadd.s32 %s93, 1
    %p97 = scmp.eq.s32.totalorder %s24, 1
    %p98 = scmp.ne.s32.totalorder %s93, %s95
    %p99 = scmp.eq.s32.totalorder %s24, 0
    %p100 = por %p98, %p99
    %p101 = scmp.ne.s32.totalorder %s93, %s95
    %p102 = scmp.eq.s32.totalorder %s29, 1
    %p103 = por %p101, %p102
    %p104 = scmp.ne.s32.totalorder %s95, %s96
    %p105 = scmp.eq.s32.totalorder %s29, 0
    %p106 = por %p104, %p105
    %p107 = scmp.ne.s32.totalorder %s95, %s96
    %p108 = scmp.eq.s32.totalorder %s30, 1
    %p109 = por %p107, %p108
    %p111 = scmp.ne.s32.totalorder %s96, %s110
    %p112 = scmp.eq.s32.totalorder %s30, 0
    %p113 = por %p111, %p112
    %s115 = sadd.s32 %s114, 1
    %p118 = scmp.eq.s32.totalorder %s24, 1
    %p119 = scmp.ne.s32.totalorder %s114, %s116
    %p120 = scmp.eq.s32.totalorder %s24, 0
    %p121 = por %p119, %p120
    %p122 = scmp.ne.s32.totalorder %s114, %s116
    %p123 = scmp.eq.s32.totalorder %s29, 1
    %p124 = por %p122, %p123
    %p125 = scmp.ne.s32.totalorder %s116, %s117
    %p126 = scmp.eq.s32.totalorder %s29, 0
    %p127 = por %p125, %p126
    %p128 = scmp.ne.s32.totalorder %s116, %s117
    %p129 = scmp.eq.s32.totalorder %s30, 1
    %p130 = por %p128, %p129
    %p132 = scmp.ne.s32.totalorder %s117, %s131
    %p133 = scmp.eq.s32.totalorder %s30, 0
    %p134 = por %p132, %p133
    %s136 = sadd.s32 %s135, 1
    %p139 = scmp.eq.s32.totalorder %s24, 1
    %p140 = scmp.ne.s32.totalorder %s135, %s137
    %p141 = scmp.eq.s32.totalorder %s24, 0
    %p142 = por %p140, %p141
    %p143 = scmp.ne.s32.totalorder %s135, %s137
    %p144 = scmp.eq.s32.totalorder %s29, 1
    %p145 = por %p143, %p144
    %p146 = scmp.ne.s32.totalorder %s137, %s138
    %p147 = scmp.eq.s32.totalorder %s29, 0
    %p148 = por %p146, %p147
    %p149 = scmp.ne.s32.totalorder %s137, %s138
    %p150 = scmp.eq.s32.totalorder %s30, 1
    %p151 = por %p149, %p150
    %p153 = scmp.ne.s32.totalorder %s138, %s152
    %p154 = scmp.eq.s32.totalorder %s30, 0
    %p155 = por %p153, %p154
    %s157 = sadd.s32 %s156, 1
    %p160 = scmp.eq.s32.totalorder %s24, 1
    %p161 = scmp.ne.s32.totalorder %s156, %s158
    %p162 = scmp.eq.s32.totalorder %s24, 0
    %p163 = por %p161, %p162
    %p164 = scmp.ne.s32.totalorder %s156, %s158
    %p165 = scmp.eq.s32.totalorder %s29, 1
    %p166 = por %p164, %p165
    %p167 = scmp.ne.s32.totalorder %s158, %s159
    %p168 = scmp.eq.s32.totalorder %s29, 0
    %p169 = por %p167, %p168
    %p170 = scmp.ne.s32.totalorder %s158, %s159
    %p171 = scmp.eq.s32.totalorder %s30, 1
    %p172 = por %p170, %p171
    %p174 = scmp.ne.s32.totalorder %s159, %s173
    %p175 = scmp.eq.s32.totalorder %s30, 0
    %p176 = por %p174, %p175
    %s178 = sadd.s32 %s177, 1
    %p181 = scmp.eq.s32.totalorder %s24, 1
    %p182 = scmp.ne.s32.totalorder %s177, %s179
    %p183 = scmp.eq.s32.totalorder %s24, 0
    %p184 = por %p182, %p183
    %p185 = scmp.ne.s32.totalorder %s177, %s179
    %p186 = scmp.eq.s32.totalorder %s29, 1
    %p187 = por %p185, %p186
    %p188 = scmp.ne.s32.totalorder %s179, %s180
    %p189 = scmp.eq.s32.totalorder %s29, 0
    %p190 = por %p188, %p189
    %p191 = scmp.ne.s32.totalorder %s179, %s180
    %p192 = scmp.eq.s32.totalorder %s30, 1
    %p193 = por %p191, %p192
    %p195 = scmp.ne.s32.totalorder %s180, %s194
    %p196 = scmp.eq.s32.totalorder %s30, 0
    %p197 = por %p195, %p196
    %s199 = sadd.s32 %s198, 1
    %p202 = scmp.eq.s32.totalorder %s24, 1
    %p203 = scmp.ne.s32.totalorder %s198, %s200
    %p204 = scmp.eq.s32.totalorder %s24, 0
    %p205 = por %p203, %p204
    %p206 = scmp.ne.s32.totalorder %s198, %s200
    %p207 = scmp.eq.s32.totalorder %s29, 1
    %p208 = por %p206, %p207
    %p209 = scmp.ne.s32.totalorder %s200, %s201
    %p210 = scmp.eq.s32.totalorder %s29, 0
    %p211 = por %p209, %p210
    %p212 = scmp.ne.s32.totalorder %s200, %s201
    %p213 = scmp.eq.s32.totalorder %s30, 1
    %p214 = por %p212, %p213
    %p216 = scmp.ne.s32.totalorder %s201, %s215
    %p217 = scmp.eq.s32.totalorder %s30, 0
    %p218 = por %p216, %p217
    %s220 = sadd.s32 %s219, 1
    %p223 = scmp.eq.s32.totalorder %s24, 1
    %p224 = scmp.ne.s32.totalorder %s219, %s221
    %p225 = scmp.eq.s32.totalorder %s24, 0
    %p226 = por %p224, %p225
    %p227 = scmp.ne.s32.totalorder %s219, %s221
    %p228 = scmp.eq.s32.totalorder %s29, 1
    %p229 = por %p227, %p228
    %p230 = scmp.ne.s32.totalorder %s221, %s222
    %p231 = scmp.eq.s32.totalorder %s29, 0
    %p232 = por %p230, %p231
    %p233 = scmp.ne.s32.totalorder %s221, %s222
    %p234 = scmp.eq.s32.totalorder %s30, 1
    %p235 = por %p233, %p234
    %p237 = scmp.ne.s32.totalorder %s222, %s236
    %p238 = scmp.eq.s32.totalorder %s30, 0
    %p239 = por %p237, %p238
    %s241 = sadd.s32 %s240, 1
    %p244 = scmp.eq.s32.totalorder %s24, 1
    %p245 = scmp.ne.s32.totalorder %s240, %s242
    %p246 = scmp.eq.s32.totalorder %s24, 0
    %p247 = por %p245, %p246
    %p248 = scmp.ne.s32.totalorder %s240, %s242
    %p249 = scmp.eq.s32.totalorder %s29, 1
    %p250 = por %p248, %p249
    %p251 = scmp.ne.s32.totalorder %s242, %s243
    %p252 = scmp.eq.s32.totalorder %s29, 0
    %p253 = por %p251, %p252
    %p254 = scmp.ne.s32.totalorder %s242, %s243
    %p255 = scmp.eq.s32.totalorder %s30, 1
    %p256 = por %p254, %p255
    %p258 = scmp.ne.s32.totalorder %s243, %s257
    %p259 = scmp.eq.s32.totalorder %s30, 0
    %p260 = por %p258, %p259
    %s262 = sadd.s32 %s261, 1
    %p265 = scmp.eq.s32.totalorder %s24, 1
    %p266 = scmp.ne.s32.totalorder %s261, %s263
    %p267 = scmp.eq.s32.totalorder %s24, 0
    %p268 = por %p266, %p267
    %p269 = scmp.ne.s32.totalorder %s261, %s263
    %p270 = scmp.eq.s32.totalorder %s29, 1
    %p271 = por %p269, %p270
    %p272 = scmp.ne.s32.totalorder %s263, %s264
    %p273 = scmp.eq.s32.totalorder %s29, 0
    %p274 = por %p272, %p273
    %p275 = scmp.ne.s32.totalorder %s263, %s264
    %p276 = scmp.eq.s32.totalorder %s30, 1
    %p277 = por %p275, %p276
    %p279 = scmp.ne.s32.totalorder %s264, %s278
    %p280 = scmp.eq.s32.totalorder %s30, 0
    %p281 = por %p279, %p280
    %s283 = sadd.s32 %s282, 1
    %p286 = scmp.eq.s32.totalorder %s24, 1
    %p287 = scmp.ne.s32.totalorder %s282, %s284
    %p288 = scmp.eq.s32.totalorder %s24, 0
    %p289 = por %p287, %p288
    %p290 = scmp.ne.s32.totalorder %s282, %s284
    %p291 = scmp.eq.s32.totalorder %s29, 1
    %p292 = por %p290, %p291
    %p293 = scmp.ne.s32.totalorder %s284, %s285
    %p294 = scmp.eq.s32.totalorder %s29, 0
    %p295 = por %p293, %p294
    %p296 = scmp.ne.s32.totalorder %s284, %s285
    %p297 = scmp.eq.s32.totalorder %s30, 1
    %p298 = por %p296, %p297
    %p300 = scmp.ne.s32.totalorder %s285, %s299
    %p301 = scmp.eq.s32.totalorder %s30, 0
    %p302 = por %p300, %p301
    %s304 = sadd.s32 %s303, 1
    %p307 = scmp.eq.s32.totalorder %s24, 1
    %p308 = scmp.ne.s32.totalorder %s303, %s305
    %p309 = scmp.eq.s32.totalorder %s24, 0
    %p310 = por %p308, %p309
    %p311 = scmp.ne.s32.totalorder %s303, %s305
    %p312 = scmp.eq.s32.totalorder %s29, 1
    %p313 = por %p311, %p312
    %p314 = scmp.ne.s32.totalorder %s305, %s306
    %p315 = scmp.eq.s32.totalorder %s29, 0
    %p316 = por %p314, %p315
    %p317 = scmp.ne.s32.totalorder %s305, %s306
    %p318 = scmp.eq.s32.totalorder %s30, 1
    %p319 = por %p317, %p318
    %p321 = scmp.ne.s32.totalorder %s306, %s320
    %p322 = scmp.eq.s32.totalorder %s30, 0
    %p323 = por %p321, %p322
    %s325 = sadd.s32 %s324, 1
    %p328 = scmp.eq.s32.totalorder %s24, 1
    %p329 = scmp.ne.s32.totalorder %s324, %s326
    %p330 = scmp.eq.s32.totalorder %s24, 0
    %p331 = por %p329, %p330
    %p332 = scmp.ne.s32.totalorder %s324, %s326
    %p333 = scmp.eq.s32.totalorder %s29, 1
    %p334 = por %p332, %p333
    %p335 = scmp.ne.s32.totalorder %s326, %s327
    %p336 = scmp.eq.s32.totalorder %s29, 0
    %p337 = por %p335, %p336
    %p338 = scmp.ne.s32.totalorder %s326, %s327
    %p339 = scmp.eq.s32.totalorder %s30, 1
    %p340 = por %p338, %p339
    %p342 = scmp.ne.s32.totalorder %s327, %s341
    %p343 = scmp.eq.s32.totalorder %s30, 0
    %p344 = por %p342, %p343
    %s346 = sadd.s32 %s345, 1
    %p349 = scmp.eq.s32.totalorder %s24, 1
    %p350 = scmp.ne.s32.totalorder %s345, %s347
    %p351 = scmp.eq.s32.totalorder %s24, 0
    %p352 = por %p350, %p351
    %p353 = scmp.ne.s32.totalorder %s345, %s347
    %p354 = scmp.eq.s32.totalorder %s29, 1
    %p355 = por %p353, %p354
    %p356 = scmp.ne.s32.totalorder %s347, %s348
    %p357 = scmp.eq.s32.totalorder %s29, 0
    %p358 = por %p356, %p357
    %p359 = scmp.ne.s32.totalorder %s347, %s348
    %p360 = scmp.eq.s32.totalorder %s30, 1
    %p361 = por %p359, %p360
    %p363 = scmp.ne.s32.totalorder %s348, %s362
    %p364 = scmp.eq.s32.totalorder %s30, 0
    %p365 = por %p363, %p364
    %s367 = sadd.s32 %s366, 1
    %p370 = scmp.eq.s32.totalorder %s24, 1
    %p371 = scmp.ne.s32.totalorder %s366, %s368
    %p372 = scmp.eq.s32.totalorder %s24, 0
    %p373 = por %p371, %p372
    %p374 = scmp.ne.s32.totalorder %s366, %s368
    %p375 = scmp.eq.s32.totalorder %s29, 1
    %p376 = por %p374, %p375
    %p377 = scmp.ne.s32.totalorder %s368, %s369
    %p378 = scmp.eq.s32.totalorder %s29, 0
    %p379 = por %p377, %p378
    %p380 = scmp.ne.s32.totalorder %s368, %s369
    %p381 = scmp.eq.s32.totalorder %s30, 1
    %p382 = por %p380, %p381
    %p384 = scmp.ne.s32.totalorder %s369, %s383
    %p385 = scmp.eq.s32.totalorder %s30, 0
    %p386 = por %p384, %p385
    %s388 = sadd.s32 %s387, 1
    %p391 = scmp.eq.s32.totalorder %s24, 1
    %p392 = scmp.ne.s32.totalorder %s387, %s389
    %p393 = scmp.eq.s32.totalorder %s24, 0
    %p394 = por %p392, %p393
    %p395 = scmp.ne.s32.totalorder %s387, %s389
    %p396 = scmp.eq.s32.totalorder %s29, 1
    %p397 = por %p395, %p396
    %p398 = scmp.ne.s32.totalorder %s389, %s390
    %p399 = scmp.eq.s32.totalorder %s29, 0
    %p400 = por %p398, %p399
    %p401 = scmp.ne.s32.totalorder %s389, %s390
    %p402 = scmp.eq.s32.totalorder %s30, 1
    %p403 = por %p401, %p402
    %p405 = scmp.ne.s32.totalorder %s390, %s404
    %p406 = scmp.eq.s32.totalorder %s30, 0
    %p407 = por %p405, %p406
    %s409 = sadd.s32 %s408, 1
    %p412 = scmp.eq.s32.totalorder %s24, 1
    %p413 = scmp.ne.s32.totalorder %s408, %s410
    %p414 = scmp.eq.s32.totalorder %s24, 0
    %p415 = por %p413, %p414
    %p416 = scmp.ne.s32.totalorder %s408, %s410
    %p417 = scmp.eq.s32.totalorder %s29, 1
    %p418 = por %p416, %p417
    %p419 = scmp.ne.s32.totalorder %s410, %s411
    %p420 = scmp.eq.s32.totalorder %s29, 0
    %p421 = por %p419, %p420
    %p422 = scmp.ne.s32.totalorder %s410, %s411
    %p423 = scmp.eq.s32.totalorder %s30, 1
    %p424 = por %p422, %p423
    %p426 = scmp.ne.s32.totalorder %s411, %s425
    %p427 = scmp.eq.s32.totalorder %s30, 0
    %p428 = por %p426, %p427
    %s429 = ssub.s32 %s31, %s43
    %s430 = ssub.s32 %s32, %s39
    %s431 = sor.u32 %s429, %s430
    %p432 = scmp.eq.s32.totalorder %s431, 0
    %s434 = sadd.s32 %s433, 1
    %s435 = scalar_select %p432, %s433, %s434
    %p438 = pneg %p432
    %p439 = scmp.eq.s32.totalorder %s24, 1
    %p440 = por %p438, %p439
    %p441 = scmp.ne.s32.totalorder %s433, %s436
    %p442 = scmp.eq.s32.totalorder %s24, 0
    %p443 = por %p441, %p442
    %p444 = scmp.ne.s32.totalorder %s433, %s436
    %p445 = scmp.eq.s32.totalorder %s29, 1
    %p446 = por %p444, %p445
    %p447 = scmp.ne.s32.totalorder %s436, %s437
    %p448 = scmp.eq.s32.totalorder %s29, 0
    %p449 = por %p447, %p448
    %p450 = scmp.ne.s32.totalorder %s436, %s437
    %p451 = scmp.eq.s32.totalorder %s30, 1
    %p452 = por %p450, %p451
    %p454 = scmp.ne.s32.totalorder %s437, %s453
    %p455 = scmp.eq.s32.totalorder %s30, 0
    %p456 = por %p454, %p455
    %p457 = scmp.le.s32.totalorder 1, %s24
    %p458 = scmp.lt.s32.totalorder %s24, 3
    %p459 = pnand %p457, %p458
    %p460 = pneg %p459
    // Predicated region
    $region9: #{_forward_jit.1} parent=5 // pred_check
      _
    $region10: #{_forward_jit.1} parent=5 // pred_check_branch
      %462 = sbr.rel (%p459) target = $region12
    $region11: #{_forward_jit.1} parent=5 // pred_region
      %s463 = ssub.s32 %s24, 1
      // Predicated region
      $region13: #{_forward_jit.1} parent=11 // pred_check
        %p464 = pneg %p85
      $region14: #{_forward_jit.1} parent=11 // pred_check_branch
        %466 = sbr.rel (%p464) target = $region16
      $region15: #{_forward_jit.1} parent=11 // pred_region
        _
      $region16: #{_forward_jit.1} parent=11 // pred_fallthru
        _
      // Predicated region
      $region17: #{_forward_jit.1} parent=11 // pred_check
        %p467 = pneg %p106
      $region18: #{_forward_jit.1} parent=11 // pred_check_branch
        %469 = sbr.rel (%p467) target = $region20
      $region19: #{_forward_jit.1} parent=11 // pred_region
        _
      $region20: #{_forward_jit.1} parent=11 // pred_fallthru
        _
      // Predicated region
      $region21: #{_forward_jit.1} parent=11 // pred_check
        %p470 = pneg %p127
      $region22: #{_forward_jit.1} parent=11 // pred_check_branch
        %472 = sbr.rel (%p470) target = $region24
      $region23: #{_forward_jit.1} parent=11 // pred_region
        _
      $region24: #{_forward_jit.1} parent=11 // pred_fallthru
        _
      // Predicated region
      $region25: #{_forward_jit.1} parent=11 // pred_check
        %p473 = pneg %p148
      $region26: #{_forward_jit.1} parent=11 // pred_check_branch
        %475 = sbr.rel (%p473) target = $region28
      $region27: #{_forward_jit.1} parent=11 // pred_region
        _
      $region28: #{_forward_jit.1} parent=11 // pred_fallthru
        _
      // Predicated region
      $region29: #{_forward_jit.1} parent=11 // pred_check
        %p476 = pneg %p169
      $region30: #{_forward_jit.1} parent=11 // pred_check_branch
        %478 = sbr.rel (%p476) target = $region32
      $region31: #{_forward_jit.1} parent=11 // pred_region
        _
      $region32: #{_forward_jit.1} parent=11 // pred_fallthru
        _
      // Predicated region
      $region33: #{_forward_jit.1} parent=11 // pred_check
        %p479 = pneg %p190
      $region34: #{_forward_jit.1} parent=11 // pred_check_branch
        %481 = sbr.rel (%p479) target = $region36
      $region35: #{_forward_jit.1} parent=11 // pred_region
        _
      $region36: #{_forward_jit.1} parent=11 // pred_fallthru
        _
      // Predicated region
      $region37: #{_forward_jit.1} parent=11 // pred_check
        %p482 = pneg %p211
      $region38: #{_forward_jit.1} parent=11 // pred_check_branch
        %484 = sbr.rel (%p482) target = $region40
      $region39: #{_forward_jit.1} parent=11 // pred_region
        _
      $region40: #{_forward_jit.1} parent=11 // pred_fallthru
        _
      // Predicated region
      $region41: #{_forward_jit.1} parent=11 // pred_check
        %p485 = pneg %p232
      $region42: #{_forward_jit.1} parent=11 // pred_check_branch
        %487 = sbr.rel (%p485) target = $region44
      $region43: #{_forward_jit.1} parent=11 // pred_region
        _
      $region44: #{_forward_jit.1} parent=11 // pred_fallthru
        _
      // Predicated region
      $region45: #{_forward_jit.1} parent=11 // pred_check
        %p488 = pneg %p253
      $region46: #{_forward_jit.1} parent=11 // pred_check_branch
        %490 = sbr.rel (%p488) target = $region48
      $region47: #{_forward_jit.1} parent=11 // pred_region
        _
      $region48: #{_forward_jit.1} parent=11 // pred_fallthru
        _
      // Predicated region
      $region49: #{_forward_jit.1} parent=11 // pred_check
        %p491 = pneg %p274
      $region50: #{_forward_jit.1} parent=11 // pred_check_branch
        %493 = sbr.rel (%p491) target = $region52
      $region51: #{_forward_jit.1} parent=11 // pred_region
        _
      $region52: #{_forward_jit.1} parent=11 // pred_fallthru
        _
      // Predicated region
      $region53: #{_forward_jit.1} parent=11 // pred_check
        %p494 = pneg %p295
      $region54: #{_forward_jit.1} parent=11 // pred_check_branch
        %496 = sbr.rel (%p494) target = $region56
      $region55: #{_forward_jit.1} parent=11 // pred_region
        _
      $region56: #{_forward_jit.1} parent=11 // pred_fallthru
        _
      // Predicated region
      $region57: #{_forward_jit.1} parent=11 // pred_check
        %p497 = pneg %p316
      $region58: #{_forward_jit.1} parent=11 // pred_check_branch
        %499 = sbr.rel (%p497) target = $region60
      $region59: #{_forward_jit.1} parent=11 // pred_region
        _
      $region60: #{_forward_jit.1} parent=11 // pred_fallthru
        _
      // Predicated region
      $region61: #{_forward_jit.1} parent=11 // pred_check
        %p500 = pneg %p337
      $region62: #{_forward_jit.1} parent=11 // pred_check_branch
        %502 = sbr.rel (%p500) target = $region64
      $region63: #{_forward_jit.1} parent=11 // pred_region
        _
      $region64: #{_forward_jit.1} parent=11 // pred_fallthru
        _
      // Predicated region
      $region65: #{_forward_jit.1} parent=11 // pred_check
        %p503 = pneg %p358
      $region66: #{_forward_jit.1} parent=11 // pred_check_branch
        %505 = sbr.rel (%p503) target = $region68
      $region67: #{_forward_jit.1} parent=11 // pred_region
        _
      $region68: #{_forward_jit.1} parent=11 // pred_fallthru
        _
      // Predicated region
      $region69: #{_forward_jit.1} parent=11 // pred_check
        %p506 = pneg %p379
      $region70: #{_forward_jit.1} parent=11 // pred_check_branch
        %508 = sbr.rel (%p506) target = $region72
      $region71: #{_forward_jit.1} parent=11 // pred_region
        _
      $region72: #{_forward_jit.1} parent=11 // pred_fallthru
        _
      // Predicated region
      $region73: #{_forward_jit.1} parent=11 // pred_check
        %p509 = pneg %p400
      $region74: #{_forward_jit.1} parent=11 // pred_check_branch
        %511 = sbr.rel (%p509) target = $region76
      $region75: #{_forward_jit.1} parent=11 // pred_region
        _
      $region76: #{_forward_jit.1} parent=11 // pred_fallthru
        _
      // Predicated region
      $region77: #{_forward_jit.1} parent=11 // pred_check
        %p512 = pneg %p421
      $region78: #{_forward_jit.1} parent=11 // pred_check_branch
        %514 = sbr.rel (%p512) target = $region80
      $region79: #{_forward_jit.1} parent=11 // pred_region
        _
      $region80: #{_forward_jit.1} parent=11 // pred_fallthru
        _
    $region12: #{_forward_jit.1} parent=5 // pred_fallthru
      _
    %p515 = scmp.lt.s32.totalorder %s24, 2
    // Predicated region
    $region81: #{_forward_jit.1} parent=5 // pred_check
      %p516 = pneg %p515
    $region82: #{_forward_jit.1} parent=5 // pred_check_branch
      %518 = sbr.rel (%p516) target = $region84
    $region83: #{_forward_jit.1} parent=5 // pred_region
      // Predicated region
      $region85: #{_forward_jit.1} parent=83 // pred_check
        %p519 = pneg %p58
      $region86: #{_forward_jit.1} parent=83 // pred_check_branch
        %521 = sbr.rel (%p519) target = $region88
      $region87: #{_forward_jit.1} parent=83 // pred_region
        %s522 = smul.u32 2, %s32
        %p523 = scmp.lt.s32.totalorder %s31, 1
        %s524 = scalar_select %p523, %s31, 1
        %p525 = scmp.lt.s32.totalorder %s522, 1
        %s526 = scalar_select %p525, %s522, 1
        %s527 = smul.addr %s524, 2
        %s528 = sadd.s32 %s526, %s527
        %s529 = smul.addr %s528, 2
        %s530 = scalar_lea.vmem %s0, %s529
        %s531 = smul.u32 2, %s32
      $region88: #{_forward_jit.1} parent=83 // pred_fallthru
        _
    $region84: #{_forward_jit.1} parent=5 // pred_fallthru
      _
    %p532 = scmp.le.s32.totalorder 1, %s24
    %p533 = scmp.lt.s32.totalorder %s24, 3
    %p534 = pnand %p532, %p533
    %p535 = pneg %p534
    // Predicated region
    $region89: #{_forward_jit.1} parent=5 // pred_check
      _
    $region90: #{_forward_jit.1} parent=5 // pred_check_branch
      %537 = sbr.rel (%p534) target = $region92
    $region91: #{_forward_jit.1} parent=5 // pred_region
      %s538 = ssub.s32 %s24, 1
      %s539 = smul.u32 2, %s34
      %p540 = scmp.lt.s32.totalorder %s33, 1
      %s541 = scalar_select %p540, %s33, 1
      %p542 = scmp.lt.s32.totalorder %s539, 1
      %s543 = scalar_select %p542, %s539, 1
      %s544 = smul.addr %s541, 2
      %s545 = sadd.s32 %s543, %s544
      %s546 = smul.addr %s545, 2
      %s547 = scalar_lea.vmem %s0, %s546
      %p548 = pneg %p64
      %p549 = pneg %p61
      %p550 = pneg %p85
      %p551 = pneg %p82
      %p552 = pneg %p106
      %p553 = pneg %p103
      %p554 = pneg %p127
      %p555 = pneg %p124
      %p556 = pneg %p148
      %p557 = pneg %p145
      %p558 = pneg %p169
      %p559 = pneg %p166
      %p560 = pneg %p190
      %p561 = pneg %p187
      %p562 = pneg %p211
      %p563 = pneg %p208
      %p564 = pneg %p232
      %p565 = pneg %p229
      %p566 = pneg %p253
      %p567 = pneg %p250
      %p568 = pneg %p274
      %p569 = pneg %p271
      %p570 = pneg %p295
      %p571 = pneg %p292
      %p572 = pneg %p316
      %p573 = pneg %p313
      %p574 = pneg %p337
      %p575 = pneg %p334
      %p576 = pneg %p358
      %p577 = pneg %p355
      %p578 = pneg %p379
      %p579 = pneg %p376
      %p580 = pneg %p400
      %p581 = pneg %p397
      %p582 = pneg %p421
      %p583 = pneg %p418
      %p584 = pneg %p449
      %p585 = pneg %p446
      %s586 = smul.u32 2, %s34
      %p587 = scmp.lt.s32.totalorder %s33, 1
      %s588 = scalar_select %p587, %s33, 1
      %p589 = scmp.lt.s32.totalorder %s586, 1
      %s590 = scalar_select %p589, %s586, 1
      %s591 = smul.addr %s588, 2
      %s592 = sadd.s32 %s590, %s591
      %s593 = smul.addr %s592, 2
      %s594 = scalar_lea.vmem %s18, %s593
      %s595 = smul.u32 2, %s34
      %p596 = scmp.lt.s32.totalorder %s33, 1
      %s597 = scalar_select %p596, %s33, 1
      %p598 = scmp.lt.s32.totalorder %s595, 1
      %s599 = scalar_select %p598, %s595, 1
      %s600 = smul.addr %s597, 2
      %s601 = sadd.s32 %s599, %s600
      %s602 = smul.addr %s601, 2
      %s603 = scalar_lea.vmem %s0, %s602
      %s604 = smul.u32 2, %s34
      %s605 = smul.u32 2, %s34
      %p606 = scmp.lt.s32.totalorder %s33, 1
      %s607 = scalar_select %p606, %s33, 1
      %p608 = scmp.lt.s32.totalorder %s605, 1
      %s609 = scalar_select %p608, %s605, 1
      %s610 = smul.addr %s607, 2
      %s611 = sadd.s32 %s609, %s610
      %s612 = smul.addr %s611, 2
      %s613 = scalar_lea.vmem %s18, %s612
      %s614 = smul.u32 2, %s34
      %v616 = vld [vmem:[%s1] sm:$0xff]
      %v617 = vld [vmem:[%s1 + $0x8] sm:$0xff]
      %v618 = vld [vmem:[%s4] sm:$0xf]
      %v619 = vld [vmem:[%s4 + $0x4] sm:$0xf]
      %v620 = vld [vmem:[%s4 + $0x8] sm:$0xf]
      %v621 = vld [vmem:[%s4 + $0xc] sm:$0xf]
      %v622 = vld [vmem:[%s7] sm:$0xf]
      %v623 = vld [vmem:[%s7 + $0x4] sm:$0xf]
      %v624 = vld [vmem:[%s7 + $0x8] sm:$0xf]
      %v625 = vld [vmem:[%s7 + $0xc] sm:$0xf]
      %v626 = vld [vmem:[%s7 + $0x10] sm:$0xf]
      %v627 = vld [vmem:[%s7 + $0x14] sm:$0xf]
      %v628 = vld [vmem:[%s7 + $0x18] sm:$0xf]
      %v629 = vld [vmem:[%s7 + $0x1c] sm:$0xf]
      %v630 = vld [vmem:[%s10] sm:$0xf]
      %v631 = vld [vmem:[%s10 + $0x4] sm:$0xf]
      %v632 = vld [vmem:[%s10 + $0x8] sm:$0xf]
      %v633 = vld [vmem:[%s10 + $0xc] sm:$0xf]
      %v634 = vld [vmem:[%s13] sm:$0xf]
      %v635 = vld [vmem:[%s13 + $0x4] sm:$0xf]
      %v636 = vld [vmem:[%s16] sm:$0x3]
      %v637 = vld [vmem:[%s2] sm:$0xff]
      %v638 = vld [vmem:[%s2 + $0x8] sm:$0xff]
      %v639 = vld [vmem:[%s5] sm:$0xff]
      %v640 = vld [vmem:[%s5 + $0x8] sm:$0xff]
      %v641 = vld [vmem:[%s5 + $0x10] sm:$0xff]
      %v642 = vld [vmem:[%s5 + $0x18] sm:$0xff]
      %v643 = vld [vmem:[%s8] sm:$0xff]
      %v644 = vld [vmem:[%s8 + $0x8] sm:$0xff]
      %v645 = vld [vmem:[%s8 + $0x10] sm:$0xff]
      %v646 = vld [vmem:[%s8 + $0x18] sm:$0xff]
      %v647 = vld [vmem:[%s8 + $0x20] sm:$0xff]
      %v648 = vld [vmem:[%s8 + $0x28] sm:$0xff]
      %v649 = vld [vmem:[%s8 + $0x30] sm:$0xff]
      %v650 = vld [vmem:[%s8 + $0x38] sm:$0xff]
      %v651 = vld [vmem:[%s11] sm:$0xff]
      %v652 = vld [vmem:[%s11 + $0x8] sm:$0xff]
      %v653 = vld [vmem:[%s11 + $0x10] sm:$0xff]
      %v654 = vld [vmem:[%s11 + $0x18] sm:$0xff]
      %v655 = vld [vmem:[%s14] sm:$0xff]
      %v656 = vld [vmem:[%s14 + $0x8] sm:$0xff]
      %v657 = vld [vmem:[%s17] sm:$0x3]
      %v658 = vld [vmem:[%s3] sm:$0xff]
      %v659 = vld [vmem:[%s3 + $0x8] sm:$0xff]
      %v660 = vpack.c.bf16 %v658, %v658
      %v661 = vpack.c.bf16 %v659, %v659
      %v662 = vld [vmem:[%s6] sm:$0xff]
      %v663 = vld [vmem:[%s6 + $0x8] sm:$0xff]
      %v664 = vld [vmem:[%s6 + $0x10] sm:$0xff]
      %v665 = vld [vmem:[%s6 + $0x18] sm:$0xff]
      %v666 = vpack.c.bf16 %v662, %v662
      %v667 = vpack.c.bf16 %v663, %v663
      %v668 = vpack.c.bf16 %v664, %v664
      %v669 = vpack.c.bf16 %v665, %v665
      %v670 = vld [vmem:[%s9] sm:$0xff]
      %v671 = vld [vmem:[%s9 + $0x8] sm:$0xff]
      %v672 = vld [vmem:[%s9 + $0x10] sm:$0xff]
      %v673 = vld [vmem:[%s9 + $0x18] sm:$0xff]
      %v674 = vld [vmem:[%s9 + $0x20] sm:$0xff]
      %v675 = vld [vmem:[%s9 + $0x28] sm:$0xff]
      %v676 = vld [vmem:[%s9 + $0x30] sm:$0xff]
      %v677 = vld [vmem:[%s9 + $0x38] sm:$0xff]
      %v678 = vpack.c.bf16 %v670, %v670
      %v679 = vpack.c.bf16 %v671, %v671
      %v680 = vpack.c.bf16 %v672, %v672
      %v681 = vpack.c.bf16 %v673, %v673
      %v682 = vpack.c.bf16 %v674, %v674
      %v683 = vpack.c.bf16 %v675, %v675
      %v684 = vpack.c.bf16 %v676, %v676
      %v685 = vpack.c.bf16 %v677, %v677
      %v686 = vld [vmem:[%s12] sm:$0xff]
      %v687 = vld [vmem:[%s12 + $0x8] sm:$0xff]
      %v688 = vld [vmem:[%s12 + $0x10] sm:$0xff]
      %v689 = vld [vmem:[%s12 + $0x18] sm:$0xff]
      %v690 = vpack.c.bf16 %v686, %v686
      %v691 = vpack.c.bf16 %v687, %v687
      %v692 = vpack.c.bf16 %v688, %v688
      %v693 = vpack.c.bf16 %v689, %v689
      %v694 = vld [vmem:[%s15] sm:$0xff]
      %v695 = vld [vmem:[%s15 + $0x8] sm:$0xff]
      %v696 = vpack.c.bf16 %v694, %v694
      %v697 = vpack.c.bf16 %v695, %v695
      %v698 = vld [vmem:[%s603] sm:$0xf]
      %700 = vset.pattern.permute.xlu0 0
      %701 = vperm.xlu0 %700, %v616
      %v702 = vpop.permute.xlu0 %701
      %705 = vset.pattern.permute.xlu0 0
      %706 = vperm.xlu0 %705, %v617
      %v707 = vpop.permute.xlu0 %706
      %v710 = vperm.slane %v698, 0
      %v711 = vperm.slane %v698, 2
      %v714 = vperm.slane %v710, 0
      %v715 = vperm.slane %v711, 0
      %v716 = vmul.f32 %v702, %v714
      %v717 = vmul.f32 %v702, %v715
      %v718 = vmul.f32 %v707, %v714
      %v719 = vmul.f32 %v707, %v715
      %721 = vset.pattern.permute.xlu0 0
      %722 = vperm.xlu0 %721, %v637
      %v723 = vpop.permute.xlu0 %722
      %726 = vset.pattern.permute.xlu0 0
      %727 = vperm.xlu0 %726, %v638
      %v728 = vpop.permute.xlu0 %727
      %v730 = vadd.f32 %v723, %v716
      %v731 = vadd.f32 %v723, %v717
      %v732 = vadd.f32 %v728, %v718
      %v733 = vadd.f32 %v728, %v719
      %734 = vset.pattern.permute.xlu0 1
      %735 = vperm.xlu0 %734, %v616
      %v736 = vpop.permute.xlu0 %735
      %738 = vset.pattern.permute.xlu0 1
      %739 = vperm.xlu0 %738, %v617
      %v740 = vpop.permute.xlu0 %739
      %v742 = vperm.slane %v698, 1
      %v743 = vperm.slane %v698, 3
      %v746 = vperm.slane %v742, 1
      %v747 = vperm.slane %v743, 1
      %v748 = vmul.f32 %v736, %v746
      %v749 = vmul.f32 %v736, %v747
      %v750 = vmul.f32 %v740, %v746
      %v751 = vmul.f32 %v740, %v747
      %v752 = vadd.f32 %v730, %v748
      %v753 = vadd.f32 %v731, %v749
      %v754 = vadd.f32 %v732, %v750
      %v755 = vadd.f32 %v733, %v751
      %v756 = vpack.c.bf16 %v753, %v752
      %v757 = vpack.c.bf16 %v755, %v754
      %v758 = vunpack.c.l.bf16 %v756
      %v759 = vunpack.c.h.bf16 %v756
      %v760 = vunpack.c.l.bf16 %v757
      %v761 = vunpack.c.h.bf16 %v757
      %vm762 = vcmp.ge.f32.partialorder %v758, 0.0
      %vm763 = vcmp.ge.f32.partialorder %v759, 0.0
      %vm764 = vcmp.ge.f32.partialorder %v760, 0.0
      %vm765 = vcmp.ge.f32.partialorder %v761, 0.0
      %767 = vset.pattern.permute.xlu0 0
      %768 = vperm.xlu0 %767, %v660
      %v769 = vpop.permute.xlu0 %768
      %v772 = vunpack.c.l.s4 839922192
      %v773 = vunpack.c.0.s8 %v772
      %v774 = vperm.slane %v769, %v773
      %776 = vset.pattern.permute.xlu0 0
      %777 = vperm.xlu0 %776, %v661
      %v778 = vpop.permute.xlu0 %777
      %v781 = vunpack.c.l.s4 839922192
      %v782 = vunpack.c.0.s8 %v781
      %v783 = vperm.slane %v778, %v782
      %v784 = vunpack.c.l.bf16 %v774
      %v785 = vunpack.c.l.bf16 %v783
      %v786 = vmul.f32 %v758, %v784
      %v787 = vmul.f32 %v759, %v784
      %v788 = vmul.f32 %v760, %v785
      %v789 = vmul.f32 %v761, %v785
      %v790 = vpack.c.bf16 %v787, %v786
      %v791 = vpack.c.bf16 %v789, %v788
      %vm792 = vmpackc.low %vm763, %vm762
      %vm793 = vmpackc.low %vm765, %vm764
      %v794 = vsel %vm792, %v756, %v790
      %v795 = vsel %vm793, %v757, %v791
      %797 = vset.pattern.permute.xlu0 0
      %798 = vperm.xlu0 %797, %v639
      %v799 = vpop.permute.xlu0 %798
      %802 = vset.pattern.permute.xlu0 0
      %803 = vperm.xlu0 %802, %v640
      %v804 = vpop.permute.xlu0 %803
      %807 = vset.pattern.permute.xlu0 0
      %808 = vperm.xlu0 %807, %v641
      %v809 = vpop.permute.xlu0 %808
      %812 = vset.pattern.permute.xlu0 0
      %813 = vperm.xlu0 %812, %v642
      %v814 = vpop.permute.xlu0 %813
      %v820 = vunpack.c.l.b16 %v618
      %v821 = vunpack.c.l.b16 %v619
      %v822 = vunpack.c.l.b16 %v620
      %v823 = vunpack.c.l.b16 %v621
      %v824 = vpack.c.b16 %v821, %v820
      %v825 = vpack.c.b16 %v823, %v822
      %v828 = vunpack.c.l.b16 %v794
      %v829 = vunpack.c.h.b16 %v794
      %v830 = vunpack.c.l.b16 %v795
      %v831 = vunpack.c.h.b16 %v795
      %v832 = vpack.c.b16 %v830, %v828
      %v833 = vpack.c.b16 %v831, %v829
      %vm836 = vcmask 130048
      %v838 = vsel %vm836, %v824, 0
      %v841 = vsel %vm836, %v825, 0
      %843 = vmatpush.bf16.msra.mxu0 0
      %844 = vmatpush.bf16.msra.mxu0 0
      %845 = vmatpush.bf16.msra.mxu0 0
      %846 = vmatpush.bf16.msra.mxu0 0
      %847 = vmatpush.bf16.msra.mxu0 0
      %848 = vmatpush.bf16.msra.mxu0 0
      %849 = vmatpush.bf16.msra.mxu0 0
      %850 = vmatpush.bf16.msra.mxu0 %v832
      %851 = vmatmul.bf16.gmra.mxu0 %v838
      %v852 = vpop.f32.mrf.mxu0
      %v853 = vadd.f32 %v799, %v852
      %v854 = vpop.f32.mrf.mxu0
      %v855 = vadd.f32 %v804, %v854
      %856 = vmatmul.bf16.gmra.mxu0 %v841
      %v857 = vpop.f32.mrf.mxu0
      %v858 = vadd.f32 %v809, %v857
      %v859 = vpop.f32.mrf.mxu0
      %v860 = vadd.f32 %v814, %v859
      %861 = vdwg.mxu0
      %862 = vmatpush.bf16.msra.mxu0 0
      %863 = vmatpush.bf16.msra.mxu0 0
      %864 = vmatpush.bf16.msra.mxu0 0
      %865 = vmatpush.bf16.msra.mxu0 0
      %866 = vmatpush.bf16.msra.mxu0 0
      %867 = vmatpush.bf16.msra.mxu0 0
      %868 = vmatpush.bf16.msra.mxu0 0
      %869 = vmatpush.bf16.msra.mxu0 %v833
      %870 = vmatmul.bf16.gmra.mxu0 %v838
      %v871 = vpop.f32.mrf.mxu0
      %v872 = vadd.f32 %v799, %v871
      %v873 = vpop.f32.mrf.mxu0
      %v874 = vadd.f32 %v804, %v873
      %875 = vmatmul.bf16.gmra.mxu0 %v841
      %v876 = vpop.f32.mrf.mxu0
      %v877 = vadd.f32 %v809, %v876
      %v878 = vpop.f32.mrf.mxu0
      %v879 = vadd.f32 %v814, %v878
      %880 = vdwg.mxu0
      %v881 = vpack.c.bf16 %v872, %v853
      %v882 = vpack.c.bf16 %v874, %v855
      %v883 = vpack.c.bf16 %v877, %v858
      %v884 = vpack.c.bf16 %v879, %v860
      %v885 = vunpack.c.l.bf16 %v881
      %v886 = vunpack.c.h.bf16 %v881
      %v887 = vunpack.c.l.bf16 %v882
      %v888 = vunpack.c.h.bf16 %v882
      %v889 = vunpack.c.l.bf16 %v883
      %v890 = vunpack.c.h.bf16 %v883
      %v891 = vunpack.c.l.bf16 %v884
      %v892 = vunpack.c.h.bf16 %v884
      %vm893 = vcmp.ge.f32.partialorder %v885, 0.0
      %vm894 = vcmp.ge.f32.partialorder %v886, 0.0
      %vm895 = vcmp.ge.f32.partialorder %v887, 0.0
      %vm896 = vcmp.ge.f32.partialorder %v888, 0.0
      %vm897 = vcmp.ge.f32.partialorder %v889, 0.0
      %vm898 = vcmp.ge.f32.partialorder %v890, 0.0
      %vm899 = vcmp.ge.f32.partialorder %v891, 0.0
      %vm900 = vcmp.ge.f32.partialorder %v892, 0.0
      %902 = vset.pattern.permute.xlu0 0
      %903 = vperm.xlu0 %902, %v666
      %v904 = vpop.permute.xlu0 %903
      %v907 = vunpack.c.l.s4 839922192
      %v908 = vunpack.c.0.s8 %v907
      %v909 = vperm.slane %v904, %v908
      %911 = vset.pattern.permute.xlu0 0
      %912 = vperm.xlu0 %911, %v667
      %v913 = vpop.permute.xlu0 %912
      %v916 = vunpack.c.l.s4 839922192
      %v917 = vunpack.c.0.s8 %v916
      %v918 = vperm.slane %v913, %v917
      %920 = vset.pattern.permute.xlu0 0
      %921 = vperm.xlu0 %920, %v668
      %v922 = vpop.permute.xlu0 %921
      %v925 = vunpack.c.l.s4 839922192
      %v926 = vunpack.c.0.s8 %v925
      %v927 = vperm.slane %v922, %v926
      %929 = vset.pattern.permute.xlu0 0
      %930 = vperm.xlu0 %929, %v669
      %v931 = vpop.permute.xlu0 %930
      %v934 = vunpack.c.l.s4 839922192
      %v935 = vunpack.c.0.s8 %v934
      %v936 = vperm.slane %v931, %v935
      %v937 = vunpack.c.l.bf16 %v909
      %v938 = vunpack.c.l.bf16 %v918
      %v939 = vunpack.c.l.bf16 %v927
      %v940 = vunpack.c.l.bf16 %v936
      %v941 = vmul.f32 %v885, %v937
      %v942 = vmul.f32 %v886, %v937
      %v943 = vmul.f32 %v887, %v938
      %v944 = vmul.f32 %v888, %v938
      %v945 = vmul.f32 %v889, %v939
      %v946 = vmul.f32 %v890, %v939
      %v947 = vmul.f32 %v891, %v940
      %v948 = vmul.f32 %v892, %v940
      %v949 = vpack.c.bf16 %v942, %v941
      %v950 = vpack.c.bf16 %v944, %v943
      %v951 = vpack.c.bf16 %v946, %v945
      %v952 = vpack.c.bf16 %v948, %v947
      %vm953 = vmpackc.low %vm894, %vm893
      %vm954 = vmpackc.low %vm896, %vm895
      %vm955 = vmpackc.low %vm898, %vm897
      %vm956 = vmpackc.low %vm900, %vm899
      %v957 = vsel %vm953, %v881, %v949
      %v958 = vsel %vm954, %v882, %v950
      %v959 = vsel %vm955, %v883, %v951
      %v960 = vsel %vm956, %v884, %v952
      %962 = vset.pattern.permute.xlu0 0
      %963 = vperm.xlu0 %962, %v643
      %v964 = vpop.permute.xlu0 %963
      %967 = vset.pattern.permute.xlu0 0
      %968 = vperm.xlu0 %967, %v644
      %v969 = vpop.permute.xlu0 %968
      %972 = vset.pattern.permute.xlu0 0
      %973 = vperm.xlu0 %972, %v645
      %v974 = vpop.permute.xlu0 %973
      %977 = vset.pattern.permute.xlu0 0
      %978 = vperm.xlu0 %977, %v646
      %v979 = vpop.permute.xlu0 %978
      %982 = vset.pattern.permute.xlu0 0
      %983 = vperm.xlu0 %982, %v647
      %v984 = vpop.permute.xlu0 %983
      %987 = vset.pattern.permute.xlu0 0
      %988 = vperm.xlu0 %987, %v648
      %v989 = vpop.permute.xlu0 %988
      %992 = vset.pattern.permute.xlu0 0
      %993 = vperm.xlu0 %992, %v649
      %v994 = vpop.permute.xlu0 %993
      %997 = vset.pattern.permute.xlu0 0
      %998 = vperm.xlu0 %997, %v650
      %v999 = vpop.permute.xlu0 %998
      %v1009 = vunpack.c.l.b16 %v622
      %v1010 = vunpack.c.l.b16 %v623
      %v1011 = vunpack.c.l.b16 %v624
      %v1012 = vunpack.c.l.b16 %v625
      %v1013 = vunpack.c.l.b16 %v626
      %v1014 = vunpack.c.l.b16 %v627
      %v1015 = vunpack.c.l.b16 %v628
      %v1016 = vunpack.c.l.b16 %v629
      %v1017 = vpack.c.b16 %v1010, %v1009
      %v1018 = vpack.c.b16 %v1012, %v1011
      %v1019 = vpack.c.b16 %v1014, %v1013
      %v1020 = vpack.c.b16 %v1016, %v1015
      %v1025 = vunpack.c.l.b16 %v957
      %v1026 = vunpack.c.h.b16 %v957
      %v1027 = vunpack.c.l.b16 %v958
      %v1028 = vunpack.c.h.b16 %v958
      %v1029 = vunpack.c.l.b16 %v959
      %v1030 = vunpack.c.h.b16 %v959
      %v1031 = vunpack.c.l.b16 %v960
      %v1032 = vunpack.c.h.b16 %v960
      %v1033 = vpack.c.b16 %v1027, %v1025
      %v1034 = vpack.c.b16 %v1028, %v1026
      %v1035 = vpack.c.b16 %v1031, %v1029
      %v1036 = vpack.c.b16 %v1032, %v1030
      %vm1041 = vcmask 261120
      %v1043 = vsel %vm1041, %v1017, 0
      %v1046 = vsel %vm1041, %v1018, 0
      %v1049 = vsel %vm1041, %v1019, 0
      %v1052 = vsel %vm1041, %v1020, 0
      %1054 = vmatpush.bf16.msra.mxu0 0
      %1055 = vmatpush.bf16.msra.mxu0 0
      %1056 = vmatpush.bf16.msra.mxu0 0
      %1057 = vmatpush.bf16.msra.mxu0 0
      %1058 = vmatpush.bf16.msra.mxu0 0
      %1059 = vmatpush.bf16.msra.mxu0 0
      %1060 = vmatpush.bf16.msra.mxu0 %v1035
      %1061 = vmatpush.bf16.msra.mxu0 %v1033
      %1062 = vmatmul.bf16.gmra.mxu0 %v1043
      %v1063 = vpop.f32.mrf.mxu0
      %v1064 = vadd.f32 %v964, %v1063
      %v1065 = vpop.f32.mrf.mxu0
      %v1066 = vadd.f32 %v969, %v1065
      %1067 = vmatmul.bf16.gmra.mxu0 %v1046
      %v1068 = vpop.f32.mrf.mxu0
      %v1069 = vadd.f32 %v974, %v1068
      %v1070 = vpop.f32.mrf.mxu0
      %v1071 = vadd.f32 %v979, %v1070
      %1072 = vmatmul.bf16.gmra.mxu0 %v1049
      %v1073 = vpop.f32.mrf.mxu0
      %v1074 = vadd.f32 %v984, %v1073
      %v1075 = vpop.f32.mrf.mxu0
      %v1076 = vadd.f32 %v989, %v1075
      %1077 = vmatmul.bf16.gmra.mxu0 %v1052
      %v1078 = vpop.f32.mrf.mxu0
      %v1079 = vadd.f32 %v994, %v1078
      %v1080 = vpop.f32.mrf.mxu0
      %v1081 = vadd.f32 %v999, %v1080
      %1082 = vdwg.mxu0
      %1083 = vmatpush.bf16.msra.mxu0 0
      %1084 = vmatpush.bf16.msra.mxu0 0
      %1085 = vmatpush.bf16.msra.mxu0 0
      %1086 = vmatpush.bf16.msra.mxu0 0
      %1087 = vmatpush.bf16.msra.mxu0 0
      %1088 = vmatpush.bf16.msra.mxu0 0
      %1089 = vmatpush.bf16.msra.mxu0 %v1036
      %1090 = vmatpush.bf16.msra.mxu0 %v1034
      %1091 = vmatmul.bf16.gmra.mxu0 %v1043
      %v1092 = vpop.f32.mrf.mxu0
      %v1093 = vadd.f32 %v964, %v1092
      %v1094 = vpop.f32.mrf.mxu0
      %v1095 = vadd.f32 %v969, %v1094
      %1096 = vmatmul.bf16.gmra.mxu0 %v1046
      %v1097 = vpop.f32.mrf.mxu0
      %v1098 = vadd.f32 %v974, %v1097
      %v1099 = vpop.f32.mrf.mxu0
      %v1100 = vadd.f32 %v979, %v1099
      %1101 = vmatmul.bf16.gmra.mxu0 %v1049
      %v1102 = vpop.f32.mrf.mxu0
      %v1103 = vadd.f32 %v984, %v1102
      %v1104 = vpop.f32.mrf.mxu0
      %v1105 = vadd.f32 %v989, %v1104
      %1106 = vmatmul.bf16.gmra.mxu0 %v1052
      %v1107 = vpop.f32.mrf.mxu0
      %v1108 = vadd.f32 %v994, %v1107
      %v1109 = vpop.f32.mrf.mxu0
      %v1110 = vadd.f32 %v999, %v1109
      %1111 = vdwg.mxu0
      %v1112 = vpack.c.bf16 %v1093, %v1064
      %v1113 = vpack.c.bf16 %v1095, %v1066
      %v1114 = vpack.c.bf16 %v1098, %v1069
      %v1115 = vpack.c.bf16 %v1100, %v1071
      %v1116 = vpack.c.bf16 %v1103, %v1074
      %v1117 = vpack.c.bf16 %v1105, %v1076
      %v1118 = vpack.c.bf16 %v1108, %v1079
      %v1119 = vpack.c.bf16 %v1110, %v1081
      %v1120 = vunpack.c.l.bf16 %v1112
      %v1121 = vunpack.c.h.bf16 %v1112
      %v1122 = vunpack.c.l.bf16 %v1113
      %v1123 = vunpack.c.h.bf16 %v1113
      %v1124 = vunpack.c.l.bf16 %v1114
      %v1125 = vunpack.c.h.bf16 %v1114
      %v1126 = vunpack.c.l.bf16 %v1115
      %v1127 = vunpack.c.h.bf16 %v1115
      %v1128 = vunpack.c.l.bf16 %v1116
      %v1129 = vunpack.c.h.bf16 %v1116
      %v1130 = vunpack.c.l.bf16 %v1117
      %v1131 = vunpack.c.h.bf16 %v1117
      %v1132 = vunpack.c.l.bf16 %v1118
      %v1133 = vunpack.c.h.bf16 %v1118
      %v1134 = vunpack.c.l.bf16 %v1119
      %v1135 = vunpack.c.h.bf16 %v1119
      %vm1136 = vcmp.ge.f32.partialorder %v1120, 0.0
      %vm1137 = vcmp.ge.f32.partialorder %v1121, 0.0
      %vm1138 = vcmp.ge.f32.partialorder %v1122, 0.0
      %vm1139 = vcmp.ge.f32.partialorder %v1123, 0.0
      %vm1140 = vcmp.ge.f32.partialorder %v1124, 0.0
      %vm1141 = vcmp.ge.f32.partialorder %v1125, 0.0
      %vm1142 = vcmp.ge.f32.partialorder %v1126, 0.0
      %vm1143 = vcmp.ge.f32.partialorder %v1127, 0.0
      %vm1144 = vcmp.ge.f32.partialorder %v1128, 0.0
      %vm1145 = vcmp.ge.f32.partialorder %v1129, 0.0
      %vm1146 = vcmp.ge.f32.partialorder %v1130, 0.0
      %vm1147 = vcmp.ge.f32.partialorder %v1131, 0.0
      %vm1148 = vcmp.ge.f32.partialorder %v1132, 0.0
      %vm1149 = vcmp.ge.f32.partialorder %v1133, 0.0
      %vm1150 = vcmp.ge.f32.partialorder %v1134, 0.0
      %vm1151 = vcmp.ge.f32.partialorder %v1135, 0.0
      %1153 = vset.pattern.permute.xlu0 0
      %1154 = vperm.xlu0 %1153, %v678
      %v1155 = vpop.permute.xlu0 %1154
      %v1158 = vunpack.c.l.s4 839922192
      %v1159 = vunpack.c.0.s8 %v1158
      %v1160 = vperm.slane %v1155, %v1159
      %1162 = vset.pattern.permute.xlu0 0
      %1163 = vperm.xlu0 %1162, %v679
      %v1164 = vpop.permute.xlu0 %1163
      %v1167 = vunpack.c.l.s4 839922192
      %v1168 = vunpack.c.0.s8 %v1167
      %v1169 = vperm.slane %v1164, %v1168
      %1171 = vset.pattern.permute.xlu0 0
      %1172 = vperm.xlu0 %1171, %v680
      %v1173 = vpop.permute.xlu0 %1172
      %v1176 = vunpack.c.l.s4 839922192
      %v1177 = vunpack.c.0.s8 %v1176
      %v1178 = vperm.slane %v1173, %v1177
      %1180 = vset.pattern.permute.xlu0 0
      %1181 = vperm.xlu0 %1180, %v681
      %v1182 = vpop.permute.xlu0 %1181
      %v1185 = vunpack.c.l.s4 839922192
      %v1186 = vunpack.c.0.s8 %v1185
      %v1187 = vperm.slane %v1182, %v1186
      %1189 = vset.pattern.permute.xlu0 0
      %1190 = vperm.xlu0 %1189, %v682
      %v1191 = vpop.permute.xlu0 %1190
      %v1194 = vunpack.c.l.s4 839922192
      %v1195 = vunpack.c.0.s8 %v1194
      %v1196 = vperm.slane %v1191, %v1195
      %1198 = vset.pattern.permute.xlu0 0
      %1199 = vperm.xlu0 %1198, %v683
      %v1200 = vpop.permute.xlu0 %1199
      %v1203 = vunpack.c.l.s4 839922192
      %v1204 = vunpack.c.0.s8 %v1203
      %v1205 = vperm.slane %v1200, %v1204
      %1207 = vset.pattern.permute.xlu0 0
      %1208 = vperm.xlu0 %1207, %v684
      %v1209 = vpop.permute.xlu0 %1208
      %v1212 = vunpack.c.l.s4 839922192
      %v1213 = vunpack.c.0.s8 %v1212
      %v1214 = vperm.slane %v1209, %v1213
      %1216 = vset.pattern.permute.xlu0 0
      %1217 = vperm.xlu0 %1216, %v685
      %v1218 = vpop.permute.xlu0 %1217
      %v1221 = vunpack.c.l.s4 839922192
      %v1222 = vunpack.c.0.s8 %v1221
      %v1223 = vperm.slane %v1218, %v1222
      %v1224 = vunpack.c.l.bf16 %v1160
      %v1225 = vunpack.c.l.bf16 %v1169
      %v1226 = vunpack.c.l.bf16 %v1178
      %v1227 = vunpack.c.l.bf16 %v1187
      %v1228 = vunpack.c.l.bf16 %v1196
      %v1229 = vunpack.c.l.bf16 %v1205
      %v1230 = vunpack.c.l.bf16 %v1214
      %v1231 = vunpack.c.l.bf16 %v1223
      %v1232 = vmul.f32 %v1120, %v1224
      %v1233 = vmul.f32 %v1121, %v1224
      %v1234 = vmul.f32 %v1122, %v1225
      %v1235 = vmul.f32 %v1123, %v1225
      %v1236 = vmul.f32 %v1124, %v1226
      %v1237 = vmul.f32 %v1125, %v1226
      %v1238 = vmul.f32 %v1126, %v1227
      %v1239 = vmul.f32 %v1127, %v1227
      %v1240 = vmul.f32 %v1128, %v1228
      %v1241 = vmul.f32 %v1129, %v1228
      %v1242 = vmul.f32 %v1130, %v1229
      %v1243 = vmul.f32 %v1131, %v1229
      %v1244 = vmul.f32 %v1132, %v1230
      %v1245 = vmul.f32 %v1133, %v1230
      %v1246 = vmul.f32 %v1134, %v1231
      %v1247 = vmul.f32 %v1135, %v1231
      %v1248 = vpack.c.bf16 %v1233, %v1232
      %v1249 = vpack.c.bf16 %v1235, %v1234
      %v1250 = vpack.c.bf16 %v1237, %v1236
      %v1251 = vpack.c.bf16 %v1239, %v1238
      %v1252 = vpack.c.bf16 %v1241, %v1240
      %v1253 = vpack.c.bf16 %v1243, %v1242
      %v1254 = vpack.c.bf16 %v1245, %v1244
      %v1255 = vpack.c.bf16 %v1247, %v1246
      %vm1256 = vmpackc.low %vm1137, %vm1136
      %vm1257 = vmpackc.low %vm1139, %vm1138
      %vm1258 = vmpackc.low %vm1141, %vm1140
      %vm1259 = vmpackc.low %vm1143, %vm1142
      %vm1260 = vmpackc.low %vm1145, %vm1144
      %vm1261 = vmpackc.low %vm1147, %vm1146
      %vm1262 = vmpackc.low %vm1149, %vm1148
      %vm1263 = vmpackc.low %vm1151, %vm1150
      %v1264 = vsel %vm1256, %v1112, %v1248
      %v1265 = vsel %vm1257, %v1113, %v1249
      %v1266 = vsel %vm1258, %v1114, %v1250
      %v1267 = vsel %vm1259, %v1115, %v1251
      %v1268 = vsel %vm1260, %v1116, %v1252
      %v1269 = vsel %vm1261, %v1117, %v1253
      %v1270 = vsel %vm1262, %v1118, %v1254
      %v1271 = vsel %vm1263, %v1119, %v1255
      %1273 = vset.pattern.permute.xlu0 0
      %1274 = vperm.xlu0 %1273, %v651
      %v1275 = vpop.permute.xlu0 %1274
      %1278 = vset.pattern.permute.xlu0 0
      %1279 = vperm.xlu0 %1278, %v652
      %v1280 = vpop.permute.xlu0 %1279
      %1283 = vset.pattern.permute.xlu0 0
      %1284 = vperm.xlu0 %1283, %v653
      %v1285 = vpop.permute.xlu0 %1284
      %1288 = vset.pattern.permute.xlu0 0
      %1289 = vperm.xlu0 %1288, %v654
      %v1290 = vpop.permute.xlu0 %1289
      %v1296 = vunpack.c.l.b16 %v630
      %v1297 = vunpack.c.l.b16 %v631
      %v1298 = vunpack.c.l.b16 %v632
      %v1299 = vunpack.c.l.b16 %v633
      %v1300 = vpack.c.b16 %v1297, %v1296
      %v1301 = vpack.c.b16 %v1299, %v1298
      %v1310 = vunpack.c.l.b16 %v1264
      %v1311 = vunpack.c.h.b16 %v1264
      %v1312 = vunpack.c.l.b16 %v1265
      %v1313 = vunpack.c.h.b16 %v1265
      %v1314 = vunpack.c.l.b16 %v1266
      %v1315 = vunpack.c.h.b16 %v1266
      %v1316 = vunpack.c.l.b16 %v1267
      %v1317 = vunpack.c.h.b16 %v1267
      %v1318 = vunpack.c.l.b16 %v1268
      %v1319 = vunpack.c.h.b16 %v1268
      %v1320 = vunpack.c.l.b16 %v1269
      %v1321 = vunpack.c.h.b16 %v1269
      %v1322 = vunpack.c.l.b16 %v1270
      %v1323 = vunpack.c.h.b16 %v1270
      %v1324 = vunpack.c.l.b16 %v1271
      %v1325 = vunpack.c.h.b16 %v1271
      %v1326 = vpack.c.b16 %v1312, %v1310
      %v1327 = vpack.c.b16 %v1313, %v1311
      %v1328 = vpack.c.b16 %v1316, %v1314
      %v1329 = vpack.c.b16 %v1317, %v1315
      %v1330 = vpack.c.b16 %v1320, %v1318
      %v1331 = vpack.c.b16 %v1321, %v1319
      %v1332 = vpack.c.b16 %v1324, %v1322
      %v1333 = vpack.c.b16 %v1325, %v1323
      %vm1342 = vcmask 523264
      %v1344 = vsel %vm1342, %v1300, 0
      %v1347 = vsel %vm1342, %v1301, 0
      %1349 = vmatpush.bf16.msra.mxu0 0
      %1350 = vmatpush.bf16.msra.mxu0 0
      %1351 = vmatpush.bf16.msra.mxu0 0
      %1352 = vmatpush.bf16.msra.mxu0 0
      %1353 = vmatpush.bf16.msra.mxu0 %v1332
      %1354 = vmatpush.bf16.msra.mxu0 %v1330
      %1355 = vmatpush.bf16.msra.mxu0 %v1328
      %1356 = vmatpush.bf16.msra.mxu0 %v1326
      %1357 = vmatmul.bf16.gmra.mxu0 %v1344
      %v1358 = vpop.f32.mrf.mxu0
      %v1359 = vadd.f32 %v1275, %v1358
      %v1360 = vpop.f32.mrf.mxu0
      %v1361 = vadd.f32 %v1280, %v1360
      %1362 = vmatmul.bf16.gmra.mxu0 %v1347
      %v1363 = vpop.f32.mrf.mxu0
      %v1364 = vadd.f32 %v1285, %v1363
      %v1365 = vpop.f32.mrf.mxu0
      %v1366 = vadd.f32 %v1290, %v1365
      %1367 = vdwg.mxu0
      %1368 = vmatpush.bf16.msra.mxu0 0
      %1369 = vmatpush.bf16.msra.mxu0 0
      %1370 = vmatpush.bf16.msra.mxu0 0
      %1371 = vmatpush.bf16.msra.mxu0 0
      %1372 = vmatpush.bf16.msra.mxu0 %v1333
      %1373 = vmatpush.bf16.msra.mxu0 %v1331
      %1374 = vmatpush.bf16.msra.mxu0 %v1329
      %1375 = vmatpush.bf16.msra.mxu0 %v1327
      %1376 = vmatmul.bf16.gmra.mxu0 %v1344
      %v1377 = vpop.f32.mrf.mxu0
      %v1378 = vadd.f32 %v1275, %v1377
      %v1379 = vpop.f32.mrf.mxu0
      %v1380 = vadd.f32 %v1280, %v1379
      %1381 = vmatmul.bf16.gmra.mxu0 %v1347
      %v1382 = vpop.f32.mrf.mxu0
      %v1383 = vadd.f32 %v1285, %v1382
      %v1384 = vpop.f32.mrf.mxu0
      %v1385 = vadd.f32 %v1290, %v1384
      %1386 = vdwg.mxu0
      %v1387 = vpack.c.bf16 %v1378, %v1359
      %v1388 = vpack.c.bf16 %v1380, %v1361
      %v1389 = vpack.c.bf16 %v1383, %v1364
      %v1390 = vpack.c.bf16 %v1385, %v1366
      %v1391 = vunpack.c.l.bf16 %v1387
      %v1392 = vunpack.c.h.bf16 %v1387
      %v1393 = vunpack.c.l.bf16 %v1388
      %v1394 = vunpack.c.h.bf16 %v1388
      %v1395 = vunpack.c.l.bf16 %v1389
      %v1396 = vunpack.c.h.bf16 %v1389
      %v1397 = vunpack.c.l.bf16 %v1390
      %v1398 = vunpack.c.h.bf16 %v1390
      %vm1399 = vcmp.ge.f32.partialorder %v1391, 0.0
      %vm1400 = vcmp.ge.f32.partialorder %v1392, 0.0
      %vm1401 = vcmp.ge.f32.partialorder %v1393, 0.0
      %vm1402 = vcmp.ge.f32.partialorder %v1394, 0.0
      %vm1403 = vcmp.ge.f32.partialorder %v1395, 0.0
      %vm1404 = vcmp.ge.f32.partialorder %v1396, 0.0
      %vm1405 = vcmp.ge.f32.partialorder %v1397, 0.0
      %vm1406 = vcmp.ge.f32.partialorder %v1398, 0.0
      %1408 = vset.pattern.permute.xlu0 0
      %1409 = vperm.xlu0 %1408, %v690
      %v1410 = vpop.permute.xlu0 %1409
      %v1413 = vunpack.c.l.s4 839922192
      %v1414 = vunpack.c.0.s8 %v1413
      %v1415 = vperm.slane %v1410, %v1414
      %1417 = vset.pattern.permute.xlu0 0
      %1418 = vperm.xlu0 %1417, %v691
      %v1419 = vpop.permute.xlu0 %1418
      %v1422 = vunpack.c.l.s4 839922192
      %v1423 = vunpack.c.0.s8 %v1422
      %v1424 = vperm.slane %v1419, %v1423
      %1426 = vset.pattern.permute.xlu0 0
      %1427 = vperm.xlu0 %1426, %v692
      %v1428 = vpop.permute.xlu0 %1427
      %v1431 = vunpack.c.l.s4 839922192
      %v1432 = vunpack.c.0.s8 %v1431
      %v1433 = vperm.slane %v1428, %v1432
      %1435 = vset.pattern.permute.xlu0 0
      %1436 = vperm.xlu0 %1435, %v693
      %v1437 = vpop.permute.xlu0 %1436
      %v1440 = vunpack.c.l.s4 839922192
      %v1441 = vunpack.c.0.s8 %v1440
      %v1442 = vperm.slane %v1437, %v1441
      %v1443 = vunpack.c.l.bf16 %v1415
      %v1444 = vunpack.c.l.bf16 %v1424
      %v1445 = vunpack.c.l.bf16 %v1433
      %v1446 = vunpack.c.l.bf16 %v1442
      %v1447 = vmul.f32 %v1391, %v1443
      %v1448 = vmul.f32 %v1392, %v1443
      %v1449 = vmul.f32 %v1393, %v1444
      %v1450 = vmul.f32 %v1394, %v1444
      %v1451 = vmul.f32 %v1395, %v1445
      %v1452 = vmul.f32 %v1396, %v1445
      %v1453 = vmul.f32 %v1397, %v1446
      %v1454 = vmul.f32 %v1398, %v1446
      %v1455 = vpack.c.bf16 %v1448, %v1447
      %v1456 = vpack.c.bf16 %v1450, %v1449
      %v1457 = vpack.c.bf16 %v1452, %v1451
      %v1458 = vpack.c.bf16 %v1454, %v1453
      %vm1459 = vmpackc.low %vm1400, %vm1399
      %vm1460 = vmpackc.low %vm1402, %vm1401
      %vm1461 = vmpackc.low %vm1404, %vm1403
      %vm1462 = vmpackc.low %vm1406, %vm1405
      %v1463 = vsel %vm1459, %v1387, %v1455
      %v1464 = vsel %vm1460, %v1388, %v1456
      %v1465 = vsel %vm1461, %v1389, %v1457
      %v1466 = vsel %vm1462, %v1390, %v1458
      %1468 = vset.pattern.permute.xlu0 0
      %1469 = vperm.xlu0 %1468, %v655
      %v1470 = vpop.permute.xlu0 %1469
      %1473 = vset.pattern.permute.xlu0 0
      %1474 = vperm.xlu0 %1473, %v656
      %v1475 = vpop.permute.xlu0 %1474
      %v1479 = vunpack.c.l.b16 %v634
      %v1480 = vunpack.c.l.b16 %v635
      %v1481 = vpack.c.b16 %v1480, %v1479
      %v1486 = vunpack.c.l.b16 %v1463
      %v1487 = vunpack.c.h.b16 %v1463
      %v1488 = vunpack.c.l.b16 %v1464
      %v1489 = vunpack.c.h.b16 %v1464
      %v1490 = vunpack.c.l.b16 %v1465
      %v1491 = vunpack.c.h.b16 %v1465
      %v1492 = vunpack.c.l.b16 %v1466
      %v1493 = vunpack.c.h.b16 %v1466
      %v1494 = vpack.c.b16 %v1488, %v1486
      %v1495 = vpack.c.b16 %v1489, %v1487
      %v1496 = vpack.c.b16 %v1492, %v1490
      %v1497 = vpack.c.b16 %v1493, %v1491
      %v1503 = vsel %vm1041, %v1481, 0
      %1505 = vmatpush.bf16.msra.mxu0 0
      %1506 = vmatpush.bf16.msra.mxu0 0
      %1507 = vmatpush.bf16.msra.mxu0 0
      %1508 = vmatpush.bf16.msra.mxu0 0
      %1509 = vmatpush.bf16.msra.mxu0 0
      %1510 = vmatpush.bf16.msra.mxu0 0
      %1511 = vmatpush.bf16.msra.mxu0 %v1496
      %1512 = vmatpush.bf16.msra.mxu0 %v1494
      %1513 = vmatmul.bf16.gmra.mxu0 %v1503
      %v1514 = vpop.f32.mrf.mxu0
      %v1515 = vadd.f32 %v1470, %v1514
      %v1516 = vpop.f32.mrf.mxu0
      %v1517 = vadd.f32 %v1475, %v1516
      %1518 = vdwg.mxu0
      %1519 = vmatpush.bf16.msra.mxu0 0
      %1520 = vmatpush.bf16.msra.mxu0 0
      %1521 = vmatpush.bf16.msra.mxu0 0
      %1522 = vmatpush.bf16.msra.mxu0 0
      %1523 = vmatpush.bf16.msra.mxu0 0
      %1524 = vmatpush.bf16.msra.mxu0 0
      %1525 = vmatpush.bf16.msra.mxu0 %v1497
      %1526 = vmatpush.bf16.msra.mxu0 %v1495
      %1527 = vmatmul.bf16.gmra.mxu0 %v1503
      %v1528 = vpop.f32.mrf.mxu0
      %v1529 = vadd.f32 %v1470, %v1528
      %v1530 = vpop.f32.mrf.mxu0
      %v1531 = vadd.f32 %v1475, %v1530
      %1532 = vdwg.mxu0
      %v1533 = vpack.c.bf16 %v1529, %v1515
      %v1534 = vpack.c.bf16 %v1531, %v1517
      %v1535 = vunpack.c.l.bf16 %v1533
      %v1536 = vunpack.c.h.bf16 %v1533
      %v1537 = vunpack.c.l.bf16 %v1534
      %v1538 = vunpack.c.h.bf16 %v1534
      %vm1539 = vcmp.ge.f32.partialorder %v1535, 0.0
      %vm1540 = vcmp.ge.f32.partialorder %v1536, 0.0
      %vm1541 = vcmp.ge.f32.partialorder %v1537, 0.0
      %vm1542 = vcmp.ge.f32.partialorder %v1538, 0.0
      %1544 = vset.pattern.permute.xlu0 0
      %1545 = vperm.xlu0 %1544, %v696
      %v1546 = vpop.permute.xlu0 %1545
      %v1549 = vunpack.c.l.s4 839922192
      %v1550 = vunpack.c.0.s8 %v1549
      %v1551 = vperm.slane %v1546, %v1550
      %1553 = vset.pattern.permute.xlu0 0
      %1554 = vperm.xlu0 %1553, %v697
      %v1555 = vpop.permute.xlu0 %1554
      %v1558 = vunpack.c.l.s4 839922192
      %v1559 = vunpack.c.0.s8 %v1558
      %v1560 = vperm.slane %v1555, %v1559
      %v1561 = vunpack.c.l.bf16 %v1551
      %v1562 = vunpack.c.l.bf16 %v1560
      %v1563 = vmul.f32 %v1535, %v1561
      %v1564 = vmul.f32 %v1536, %v1561
      %v1565 = vmul.f32 %v1537, %v1562
      %v1566 = vmul.f32 %v1538, %v1562
      %v1567 = vpack.c.bf16 %v1564, %v1563
      %v1568 = vpack.c.bf16 %v1566, %v1565
      %vm1569 = vmpackc.low %vm1540, %vm1539
      %vm1570 = vmpackc.low %vm1542, %vm1541
      %v1571 = vsel %vm1569, %v1533, %v1567
      %v1572 = vsel %vm1570, %v1534, %v1568
      %v1573 = vunpack.c.l.bf16 %v1571
      %v1574 = vunpack.c.h.bf16 %v1571
      %1576 = vset.pattern.permute.xlu0 0
      %1577 = vperm.xlu0 %1576, %v636
      %v1578 = vpop.permute.xlu0 %1577
      %v1580 = vperm.slane %v1573, 0
      %v1581 = vperm.slane %v1574, 0
      %v1582 = vmul.f32 %v1578, %v1580
      %v1583 = vmul.f32 %v1578, %v1581
      %1585 = vset.pattern.permute.xlu0 0
      %1586 = vperm.xlu0 %1585, %v657
      %v1587 = vpop.permute.xlu0 %1586
      %v1589 = vadd.f32 %v1587, %v1582
      %v1590 = vadd.f32 %v1587, %v1583
      %1591 = vset.pattern.permute.xlu0 1
      %1592 = vperm.xlu0 %1591, %v636
      %v1593 = vpop.permute.xlu0 %1592
      %v1595 = vperm.slane %v1573, 1
      %v1596 = vperm.slane %v1574, 1
      %v1597 = vmul.f32 %v1593, %v1595
      %v1598 = vmul.f32 %v1593, %v1596
      %v1599 = vadd.f32 %v1589, %v1597
      %v1600 = vadd.f32 %v1590, %v1598
      %1601 = vset.pattern.permute.xlu0 2
      %1602 = vperm.xlu0 %1601, %v636
      %v1603 = vpop.permute.xlu0 %1602
      %v1605 = vperm.slane %v1573, 2
      %v1606 = vperm.slane %v1574, 2
      %v1607 = vmul.f32 %v1603, %v1605
      %v1608 = vmul.f32 %v1603, %v1606
      %v1609 = vadd.f32 %v1599, %v1607
      %v1610 = vadd.f32 %v1600, %v1608
      %1611 = vset.pattern.permute.xlu0 3
      %1612 = vperm.xlu0 %1611, %v636
      %v1613 = vpop.permute.xlu0 %1612
      %v1615 = vperm.slane %v1573, 3
      %v1616 = vperm.slane %v1574, 3
      %v1617 = vmul.f32 %v1613, %v1615
      %v1618 = vmul.f32 %v1613, %v1616
      %v1619 = vadd.f32 %v1609, %v1617
      %v1620 = vadd.f32 %v1610, %v1618
      %1621 = vset.pattern.permute.xlu0 4
      %1622 = vperm.xlu0 %1621, %v636
      %v1623 = vpop.permute.xlu0 %1622
      %v1625 = vperm.slane %v1573, 4
      %v1626 = vperm.slane %v1574, 4
      %v1627 = vmul.f32 %v1623, %v1625
      %v1628 = vmul.f32 %v1623, %v1626
      %v1629 = vadd.f32 %v1619, %v1627
      %v1630 = vadd.f32 %v1620, %v1628
      %1631 = vset.pattern.permute.xlu0 5
      %1632 = vperm.xlu0 %1631, %v636
      %v1633 = vpop.permute.xlu0 %1632
      %v1635 = vperm.slane %v1573, 5
      %v1636 = vperm.slane %v1574, 5
      %v1637 = vmul.f32 %v1633, %v1635
      %v1638 = vmul.f32 %v1633, %v1636
      %v1639 = vadd.f32 %v1629, %v1637
      %v1640 = vadd.f32 %v1630, %v1638
      %1641 = vset.pattern.permute.xlu0 6
      %1642 = vperm.xlu0 %1641, %v636
      %v1643 = vpop.permute.xlu0 %1642
      %v1645 = vperm.slane %v1573, 6
      %v1646 = vperm.slane %v1574, 6
      %v1647 = vmul.f32 %v1643, %v1645
      %v1648 = vmul.f32 %v1643, %v1646
      %v1649 = vadd.f32 %v1639, %v1647
      %v1650 = vadd.f32 %v1640, %v1648
      %1651 = vset.pattern.permute.xlu0 7
      %1652 = vperm.xlu0 %1651, %v636
      %v1653 = vpop.permute.xlu0 %1652
      %v1655 = vperm.slane %v1573, 7
      %v1656 = vperm.slane %v1574, 7
      %v1657 = vmul.f32 %v1653, %v1655
      %v1658 = vmul.f32 %v1653, %v1656
      %v1659 = vadd.f32 %v1649, %v1657
      %v1660 = vadd.f32 %v1650, %v1658
      %v1661 = vunpack.c.l.bf16 %v1572
      %v1662 = vunpack.c.h.bf16 %v1572
      %1663 = vset.pattern.permute.xlu0 8
      %1664 = vperm.xlu0 %1663, %v636
      %v1665 = vpop.permute.xlu0 %1664
      %v1667 = vperm.slane %v1661, 0
      %v1668 = vperm.slane %v1662, 0
      %v1669 = vmul.f32 %v1665, %v1667
      %v1670 = vmul.f32 %v1665, %v1668
      %v1671 = vadd.f32 %v1659, %v1669
      %v1672 = vadd.f32 %v1660, %v1670
      %1673 = vset.pattern.permute.xlu0 9
      %1674 = vperm.xlu0 %1673, %v636
      %v1675 = vpop.permute.xlu0 %1674
      %v1677 = vperm.slane %v1661, 1
      %v1678 = vperm.slane %v1662, 1
      %v1679 = vmul.f32 %v1675, %v1677
      %v1680 = vmul.f32 %v1675, %v1678
      %v1681 = vadd.f32 %v1671, %v1679
      %v1682 = vadd.f32 %v1672, %v1680
      %1683 = vset.pattern.permute.xlu0 10
      %1684 = vperm.xlu0 %1683, %v636
      %v1685 = vpop.permute.xlu0 %1684
      %v1687 = vperm.slane %v1661, 2
      %v1688 = vperm.slane %v1662, 2
      %v1689 = vmul.f32 %v1685, %v1687
      %v1690 = vmul.f32 %v1685, %v1688
      %v1691 = vadd.f32 %v1681, %v1689
      %v1692 = vadd.f32 %v1682, %v1690
      %1693 = vset.pattern.permute.xlu0 11
      %1694 = vperm.xlu0 %1693, %v636
      %v1695 = vpop.permute.xlu0 %1694
      %v1697 = vperm.slane %v1661, 3
      %v1698 = vperm.slane %v1662, 3
      %v1699 = vmul.f32 %v1695, %v1697
      %v1700 = vmul.f32 %v1695, %v1698
      %v1701 = vadd.f32 %v1691, %v1699
      %v1702 = vadd.f32 %v1692, %v1700
      %1703 = vset.pattern.permute.xlu0 12
      %1704 = vperm.xlu0 %1703, %v636
      %v1705 = vpop.permute.xlu0 %1704
      %v1707 = vperm.slane %v1661, 4
      %v1708 = vperm.slane %v1662, 4
      %v1709 = vmul.f32 %v1705, %v1707
      %v1710 = vmul.f32 %v1705, %v1708
      %v1711 = vadd.f32 %v1701, %v1709
      %v1712 = vadd.f32 %v1702, %v1710
      %1713 = vset.pattern.permute.xlu0 13
      %1714 = vperm.xlu0 %1713, %v636
      %v1715 = vpop.permute.xlu0 %1714
      %v1717 = vperm.slane %v1661, 5
      %v1718 = vperm.slane %v1662, 5
      %v1719 = vmul.f32 %v1715, %v1717
      %v1720 = vmul.f32 %v1715, %v1718
      %v1721 = vadd.f32 %v1711, %v1719
      %v1722 = vadd.f32 %v1712, %v1720
      %1723 = vset.pattern.permute.xlu0 14
      %1724 = vperm.xlu0 %1723, %v636
      %v1725 = vpop.permute.xlu0 %1724
      %v1727 = vperm.slane %v1661, 6
      %v1728 = vperm.slane %v1662, 6
      %v1729 = vmul.f32 %v1725, %v1727
      %v1730 = vmul.f32 %v1725, %v1728
      %v1731 = vadd.f32 %v1721, %v1729
      %v1732 = vadd.f32 %v1722, %v1730
      %1733 = vset.pattern.permute.xlu0 15
      %1734 = vperm.xlu0 %1733, %v636
      %v1735 = vpop.permute.xlu0 %1734
      %v1737 = vperm.slane %v1661, 7
      %v1738 = vperm.slane %v1662, 7
      %v1739 = vmul.f32 %v1735, %v1737
      %v1740 = vmul.f32 %v1735, %v1738
      %v1741 = vadd.f32 %v1731, %v1739
      %v1742 = vadd.f32 %v1732, %v1740
      %v1745 = vrot.slane %v1742, 6
      %vm1746 = vcmask 1041408
      %v1747 = vsel %vm1746, %v1741, %v1745
      %1749 = vst [vmem:[%s613] sm:$0xf] %v1747
      %s1750 = smul.u32 2, %s34
      %p1751 = scmp.lt.s32.totalorder %s33, 1
      %s1752 = scalar_select %p1751, %s33, 1
      %p1753 = scmp.lt.s32.totalorder %s1750, 1
      %s1754 = scalar_select %p1753, %s1750, 1
      %s1755 = smul.addr %s1752, 2
      %s1756 = sadd.s32 %s1754, %s1755
      %s1757 = smul.addr %s1756, 2
      %s1758 = scalar_lea.vmem %s18, %s1757
      // Predicated region
      $region93: #{_forward_jit.1} parent=91 // pred_check
        %p1759 = pneg %p446
      $region94: #{_forward_jit.1} parent=91 // pred_check_branch
        %1761 = sbr.rel (%p1759) target = $region96
      $region95: #{_forward_jit.1} parent=91 // pred_region
        %s1762 = smul.u32 2, %s34
      $region96: #{_forward_jit.1} parent=91 // pred_fallthru
        _
    $region92: #{_forward_jit.1} parent=5 // pred_fallthru
      _
    %p1763 = scmp.le.s32.totalorder 2, %s24
    // Predicated region
    $region97: #{_forward_jit.1} parent=5 // pred_check
      %p1764 = pneg %p1763
    $region98: #{_forward_jit.1} parent=5 // pred_check_branch
      %1766 = sbr.rel (%p1764) target = $region100
    $region99: #{_forward_jit.1} parent=5 // pred_region
      %s1767 = ssub.s32 %s24, 2
      // Predicated region
      $region101: #{_forward_jit.1} parent=99 // pred_check
        %p1768 = pneg %p452
      $region102: #{_forward_jit.1} parent=99 // pred_check_branch
        %1770 = sbr.rel (%p1768) target = $region104
      $region103: #{_forward_jit.1} parent=99 // pred_region
        %s1771 = smul.u32 2, %s36
        %p1772 = scmp.lt.s32.totalorder %s35, 1
        %s1773 = scalar_select %p1772, %s35, 1
        %p1774 = scmp.lt.s32.totalorder %s1771, 1
        %s1775 = scalar_select %p1774, %s1771, 1
        %s1776 = smul.addr %s1773, 2
        %s1777 = sadd.s32 %s1775, %s1776
        %s1778 = smul.addr %s1777, 2
        %s1779 = scalar_lea.vmem %s18, %s1778
      $region104: #{_forward_jit.1} parent=99 // pred_fallthru
        _
    $region100: #{_forward_jit.1} parent=5 // pred_fallthru
      _
  $region6: #{_forward_jit.1} parent=0 // loop_footer
    %s28 = sadd.s32 1, %s24
  $region7: #{_forward_jit.1} parent=0 // loop_footer_branch
    %23 = sbr.rel target = $region3
  $region8: #{_forward_jit.1} parent=0 // loop_exit
    _

</llo_original>
